<compile_context>
chip_gen: v6e
topology: v6e:2x2x1
jax: 0.10.0
libtpu: 0.0.40
codegen_flags: <defaults>
</compile_context>

<pallas_src>
import functools

import numpy as np
import jax
import jax.numpy as jnp
from jax.experimental import pallas as pl
from jax.experimental.pallas import tpu as pltpu

_LEAKY_SLOPE = 0.01  # nn.LeakyReLU() default negative_slope


def _round_up(v, m):
    return (v + m - 1) // m * m


# ----------------------------------------------------------------------------
# Pallas kernel: fused conv3x3 -> LReLU -> conv3x3 -> LReLU -> conv3x3
# ----------------------------------------------------------------------------
def _outputcv_kernel(x_ref, mask_ref, w1_ref, w2_ref, w3_ref, o_ref,
                     xcol_ref, t1_ref, t2_ref, *, L, Wp, C_inp, C_outp):
    """One program processes all N images.

    Activations are (channels, flat) with flat = n*Hp*Wp + h*Wp + w, so a 3x3
    tap (dy, dx) is a contiguous lane slice shifted by dy*Wp + dx, and each
    conv is one MXU dot with K = 9*C.
    """
    valid = mask_ref[...] > 0.5            # (1, L) bool: (h < H) & (w < W)

    def leaky(v):
        return jnp.where(v >= 0.0, v, _LEAKY_SLOPE * v)

    def conv3x3(src_ref, w_ref, cin):
        # im2col slab: 9 contiguous lane-shifted slices stacked on sublanes.
        for k in range(9):
            dy, dx = k // 3, k % 3
            s = dy * Wp + dx
            xcol_ref[k * cin:(k + 1) * cin, :] = src_ref[:, s:s + L]
        xcol = xcol_ref[0:9 * cin, :]
        # Single MXU dot: (cout, 9*cin) @ (9*cin, L) -> (cout, L) f32.
        return jnp.dot(w_ref[...], xcol, preferred_element_type=jnp.float32)

    def repack(t_ref, y):
        # Zero garbage (border) columns via select (fused with cast), then
        # store the whole activation as ONE contiguous slab shifted by Wp+1,
        # which re-pads it for the next conv.  Only the tiny head of the
        # buffer ever needs explicit zeroing.
        yb = jnp.where(valid, y, 0.0).astype(jnp.bfloat16)
        t_ref[:, 0:Wp + 1] = jnp.zeros((y.shape[0], Wp + 1), jnp.bfloat16)
        t_ref[:, Wp + 1:Wp + 1 + L] = yb

    # conv1: C_in -> C_in, LeakyReLU (intermediate never touches HBM).
    y1 = leaky(conv3x3(x_ref, w1_ref, C_inp))        # (C_inp, L) f32
    repack(t1_ref, y1)

    # conv2: C_in -> C_out(padded), LeakyReLU.
    y2 = leaky(conv3x3(t1_ref, w2_ref, C_inp))       # (C_outp, L) f32
    repack(t2_ref, y2)

    # conv3: C_out -> C_out, no activation.
    y3 = conv3x3(t2_ref, w3_ref, C_outp)             # (C_outp, L) f32
    o_ref[...] = jnp.where(valid, y3, 0.0).astype(o_ref.dtype)


# ----------------------------------------------------------------------------
# Wrapper
# ----------------------------------------------------------------------------
def output_cv_block_forward(params, x_nchw, out_ch):
    """x: (N, C_in, H, W) f32 NCHW  ->  (N, out_ch, H, W) f32 NCHW."""
    w1, w2, w3 = params["w1"], params["w2"], params["w3"]
    N, C_in, H, W = x_nchw.shape
    C_inp = w1.shape[0]
    C_outp = w3.shape[0]
    assert w1.shape == (C_inp, 9 * C_inp)
    assert w2.shape == (C_outp, 9 * C_inp)
    assert w3.shape == (C_outp, 9 * C_outp)
    assert C_in <= C_inp and out_ch <= C_outp

    Hp, Wp = H + 2, W + 2
    L = N * Hp * Wp                              # flattened (padded-width) length
    Ltot = _round_up(L + 2 * Wp + 2, 128)        # room for the largest tap shift

    # NCHW f32 -> channels-first, halo-padded, flattened, channel-padded bf16.
    xc = jnp.transpose(x_nchw, (1, 0, 2, 3))                          # (C,N,H,W)
    xc = jnp.pad(xc, ((0, C_inp - C_in), (0, 0), (1, 1), (1, 1)))
    xflat = xc.reshape(C_inp, L)
    xflat = jnp.pad(xflat, ((0, 0), (0, Ltot - L))).astype(jnp.bfloat16)

    # Static validity mask over flattened positions (1 = interior pixel).
    m2d = (np.arange(Hp)[:, None] < H) & (np.arange(Wp)[None, :] < W)
    mask = jnp.asarray(np.tile(m2d.reshape(-1), N).astype(np.float32)[None, :])

    Cmax = max(C_inp, C_outp)

    flops = 2 * N * H * W * 9 * (C_in * C_in + C_in * out_ch + out_ch * out_ch)
    bytes_accessed = (xflat.size * 2 + mask.size * 4
                      + (w1.size + w2.size + w3.size) * 2 + C_outp * L * 4)

    try:
        vmem_cap = pltpu.get_tpu_info().vmem_capacity_bytes
    except Exception:
        vmem_cap = 64 * 1024 * 1024
    vmem_limit = min(int(vmem_cap * 3 // 4), 112 * 1024 * 1024)

    out_flat = pl.pallas_call(
        functools.partial(_outputcv_kernel, L=L, Wp=Wp,
                          C_inp=C_inp, C_outp=C_outp),
        out_shape=jax.ShapeDtypeStruct((C_outp, L), jnp.float32),
        grid_spec=pltpu.PrefetchScalarGridSpec(
            num_scalar_prefetch=0,
            grid=(1,),                            # batch folded into the M/lane axis
            in_specs=[
                pl.BlockSpec((C_inp, Ltot), lambda i: (0, 0)),
                pl.BlockSpec((1, L), lambda i: (0, 0)),
                pl.BlockSpec((C_inp, 9 * C_inp), lambda i: (0, 0)),
                pl.BlockSpec((C_outp, 9 * C_inp), lambda i: (0, 0)),
                pl.BlockSpec((C_outp, 9 * C_outp), lambda i: (0, 0)),
            ],
            out_specs=pl.BlockSpec((C_outp, L), lambda i: (0, 0)),
            scratch_shapes=[
                pltpu.VMEM((9 * Cmax, L), jnp.bfloat16),    # im2col slab (reused)
                pltpu.VMEM((C_inp, Ltot), jnp.bfloat16),    # conv1 out, re-padded
                pltpu.VMEM((C_outp, Ltot), jnp.bfloat16),   # conv2 out, re-padded
            ],
        ),
        compiler_params=pltpu.CompilerParams(
            dimension_semantics=("arbitrary",),
            vmem_limit_bytes=vmem_limit,
        ),
        cost_estimate=pl.CostEstimate(
            flops=flops, transcendentals=0, bytes_accessed=bytes_accessed),
    )(xflat, mask, w1, w2, w3)

    # (C_outp, L) -> (N, out_ch, H, W); drop padded channels / garbage columns.
    out = out_flat.reshape(C_outp, N, Hp, Wp)[:out_ch, :, :H, :W]
    return jnp.transpose(out, (1, 0, 2, 3))


# ----------------------------------------------------------------------------
# Parameters (kaiming-style init; relayout to kernel format done ONCE here)
# ----------------------------------------------------------------------------
def init_params(key, in_ch, out_ch):
    """Returns (kernel_params_bf16, reference_weights_oihw_f32)."""
    ks = jax.random.split(key, 3)
    shapes = [(in_ch, in_ch), (out_ch, in_ch), (out_ch, out_ch)]
    ws_oihw = []
    for k, (co, ci) in zip(ks, shapes):
        std = (2.0 / (ci * 9)) ** 0.5
        ws_oihw.append(std * jax.random.normal(k, (co, ci, 3, 3), jnp.float32))

    c_inp = _round_up(in_ch, 8)
    c_outp = _round_up(out_ch, 8)

    def to_kernel(w, cinp, coutp):
        # (Cout,Cin,3,3) -> (coutp, 9*cinp) bf16 with row-major tap index
        # k = dy*3 + dx and channel padding zeros:  Wmat[o, k*cinp + c].
        co, ci = w.shape[0], w.shape[1]
        wt = jnp.transpose(w, (0, 2, 3, 1))                         # (co,3,3,ci)
        wt = jnp.pad(wt, ((0, coutp - co), (0, 0), (0, 0), (0, cinp - ci)))
        return wt.reshape(coutp, 9 * cinp).astype(jnp.bfloat16)

    params = {"w1": to_kernel(ws_oihw[0], c_inp, c_inp),
              "w2": to_kernel(ws_oihw[1], c_inp, c_outp),
              "w3": to_kernel(ws_oihw[2], c_outp, c_outp)}
    return params, ws_oihw


# ----------------------------------------------------------------------------
# Pure-JAX reference (same bf16 rounding points as the kernel)
# ----------------------------------------------------------------------------
def _ref_forward(ws_oihw, x_nchw):
    bf = lambda t: t.astype(jnp.bfloat16).astype(jnp.float32)

    def conv(x, w):
        return jax.lax.conv_general_dilated(
            x, w, window_strides=(1, 1), padding=((1, 1), (1, 1)),
            dimension_numbers=("NCHW", "OIHW", "NCHW"),
            precision=jax.lax.Precision.HIGHEST)

    def leaky(v):
        return jnp.where(v >= 0.0, v, _LEAKY_SLOPE * v)

    y = conv(bf(x_nchw), bf(ws_oihw[0]))
    y = conv(bf(leaky(y)), bf(ws_oihw[1]))
    y = conv(bf(leaky(y)), bf(ws_oihw[2]))
    return y


# ----------------------------------------------------------------------------
if __name__ == "__main__":
    key = jax.random.PRNGKey(0)
    k_par, k_x = jax.random.split(key)

    # OutputCvBlock(in_ch=16, out_ch=3), batch=2, 16x16 spatial.
    N, C_in, C_out, H, W = 2, 16, 3, 16, 16
    params, ws_oihw = init_params(k_par, C_in, C_out)
    x = jax.random.normal(k_x, (N, C_in, H, W), jnp.float32)

    fwd = jax.jit(functools.partial(output_cv_block_forward, out_ch=C_out))
    out = jax.block_until_ready(fwd(params, x))
    assert out.shape == (N, C_out, H, W), out.shape

    ref = jax.block_until_ready(jax.jit(_ref_forward)(ws_oihw, x))
    max_err = float(jnp.max(jnp.abs(out - ref)))
    assert max_err < 2e-2, f"mismatch vs reference: {max_err}"

    print("KERNEL_OK")
</pallas_src>

<mosaic_0001>
module attributes {stable_mosaic.version = 11 : i64} {
  func.func @_outputcv_kernel(%arg0: i32, %arg1: memref<16x768xbf16, #tpu.memory_space<vmem>>, %arg2: memref<1x648xf32, #tpu.memory_space<vmem>>, %arg3: memref<16x144xbf16, #tpu.memory_space<vmem>>, %arg4: memref<8x144xbf16, #tpu.memory_space<vmem>>, %arg5: memref<8x72xbf16, #tpu.memory_space<vmem>>, %arg6: memref<8x648xf32, #tpu.memory_space<vmem>>, %arg7: memref<144x648xbf16, #tpu.memory_space<vmem>>, %arg8: memref<16x768xbf16, #tpu.memory_space<vmem>>, %arg9: memref<8x768xbf16, #tpu.memory_space<vmem>>) attributes {dimension_semantics = [#tpu.dimension_semantics<arbitrary>], iteration_bounds = array<i64: 1>, scalar_prefetch = 0 : i64, scratch_operands = 3 : i64, tpu.core_type = #tpu.core_type<tc>, window_params = [{pipeline_mode = #tpu.pipeline_mode<synchronous>, transform_indices = @transform_0, window_bounds = array<i64: 16, 768>}, {pipeline_mode = #tpu.pipeline_mode<synchronous>, transform_indices = @transform_1, window_bounds = array<i64: 1, 648>}, {pipeline_mode = #tpu.pipeline_mode<synchronous>, transform_indices = @transform_2, window_bounds = array<i64: 16, 144>}, {pipeline_mode = #tpu.pipeline_mode<synchronous>, transform_indices = @transform_3, window_bounds = array<i64: 8, 144>}, {pipeline_mode = #tpu.pipeline_mode<synchronous>, transform_indices = @transform_4, window_bounds = array<i64: 8, 72>}, {pipeline_mode = #tpu.pipeline_mode<synchronous>, transform_indices = @transform_5, window_bounds = array<i64: 8, 648>}]} {
    %c0 = arith.constant 0 : index
    %c0_0 = arith.constant 0 : index
    %0 = vector.load %arg2[%c0, %c0_0] : memref<1x648xf32, #tpu.memory_space<vmem>>, vector<1x648xf32>
    %cst = arith.constant 5.000000e-01 : f32
    %1 = vector.broadcast %cst : f32 to vector<1x648xf32>
    %2 = arith.cmpf ogt, %0, %1 : vector<1x648xf32>
    %c0_1 = arith.constant 0 : index
    %c0_2 = arith.constant 0 : index
    %3 = vector.load %arg1[%c0_1, %c0_2] : memref<16x768xbf16, #tpu.memory_space<vmem>>, vector<16x648xbf16>
    %c0_3 = arith.constant 0 : index
    %c0_4 = arith.constant 0 : index
    %4 = vector.load %arg7[%c0_3, %c0_4] : memref<144x648xbf16, #tpu.memory_space<vmem>>, vector<16x648xbf16>
    tpu.vector_store %arg7[%c0_3, %c0_4], %3 {strides = array<i32>} : memref<144x648xbf16, #tpu.memory_space<vmem>>, vector<16x648xbf16>,
    %c0_5 = arith.constant 0 : index
    %c1 = arith.constant 1 : index
    %5 = vector.load %arg1[%c0_5, %c1] : memref<16x768xbf16, #tpu.memory_space<vmem>>, vector<16x648xbf16>
    %c16 = arith.constant 16 : index
    %c0_6 = arith.constant 0 : index
    %6 = vector.load %arg7[%c16, %c0_6] : memref<144x648xbf16, #tpu.memory_space<vmem>>, vector<16x648xbf16>
    tpu.vector_store %arg7[%c16, %c0_6], %5 {strides = array<i32>} : memref<144x648xbf16, #tpu.memory_space<vmem>>, vector<16x648xbf16>,
    %c0_7 = arith.constant 0 : index
    %c2 = arith.constant 2 : index
    %7 = vector.load %arg1[%c0_7, %c2] : memref<16x768xbf16, #tpu.memory_space<vmem>>, vector<16x648xbf16>
    %c32 = arith.constant 32 : index
    %c0_8 = arith.constant 0 : index
    %8 = vector.load %arg7[%c32, %c0_8] : memref<144x648xbf16, #tpu.memory_space<vmem>>, vector<16x648xbf16>
    tpu.vector_store %arg7[%c32, %c0_8], %7 {strides = array<i32>} : memref<144x648xbf16, #tpu.memory_space<vmem>>, vector<16x648xbf16>,
    %c0_9 = arith.constant 0 : index
    %c18 = arith.constant 18 : index
    %9 = vector.load %arg1[%c0_9, %c18] : memref<16x768xbf16, #tpu.memory_space<vmem>>, vector<16x648xbf16>
    %c48 = arith.constant 48 : index
    %c0_10 = arith.constant 0 : index
    %10 = vector.load %arg7[%c48, %c0_10] : memref<144x648xbf16, #tpu.memory_space<vmem>>, vector<16x648xbf16>
    tpu.vector_store %arg7[%c48, %c0_10], %9 {strides = array<i32>} : memref<144x648xbf16, #tpu.memory_space<vmem>>, vector<16x648xbf16>,
    %c0_11 = arith.constant 0 : index
    %c19 = arith.constant 19 : index
    %11 = vector.load %arg1[%c0_11, %c19] : memref<16x768xbf16, #tpu.memory_space<vmem>>, vector<16x648xbf16>
    %c64 = arith.constant 64 : index
    %c0_12 = arith.constant 0 : index
    %12 = vector.load %arg7[%c64, %c0_12] : memref<144x648xbf16, #tpu.memory_space<vmem>>, vector<16x648xbf16>
    tpu.vector_store %arg7[%c64, %c0_12], %11 {strides = array<i32>} : memref<144x648xbf16, #tpu.memory_space<vmem>>, vector<16x648xbf16>,
    %c0_13 = arith.constant 0 : index
    %c20 = arith.constant 20 : index
    %13 = vector.load %arg1[%c0_13, %c20] : memref<16x768xbf16, #tpu.memory_space<vmem>>, vector<16x648xbf16>
    %c80 = arith.constant 80 : index
    %c0_14 = arith.constant 0 : index
    %14 = vector.load %arg7[%c80, %c0_14] : memref<144x648xbf16, #tpu.memory_space<vmem>>, vector<16x648xbf16>
    tpu.vector_store %arg7[%c80, %c0_14], %13 {strides = array<i32>} : memref<144x648xbf16, #tpu.memory_space<vmem>>, vector<16x648xbf16>,
    %c0_15 = arith.constant 0 : index
    %c36 = arith.constant 36 : index
    %15 = vector.load %arg1[%c0_15, %c36] : memref<16x768xbf16, #tpu.memory_space<vmem>>, vector<16x648xbf16>
    %c96 = arith.constant 96 : index
    %c0_16 = arith.constant 0 : index
    %16 = vector.load %arg7[%c96, %c0_16] : memref<144x648xbf16, #tpu.memory_space<vmem>>, vector<16x648xbf16>
    tpu.vector_store %arg7[%c96, %c0_16], %15 {strides = array<i32>} : memref<144x648xbf16, #tpu.memory_space<vmem>>, vector<16x648xbf16>,
    %c0_17 = arith.constant 0 : index
    %c37 = arith.constant 37 : index
    %17 = vector.load %arg1[%c0_17, %c37] : memref<16x768xbf16, #tpu.memory_space<vmem>>, vector<16x648xbf16>
    %c112 = arith.constant 112 : index
    %c0_18 = arith.constant 0 : index
    %18 = vector.load %arg7[%c112, %c0_18] : memref<144x648xbf16, #tpu.memory_space<vmem>>, vector<16x648xbf16>
    tpu.vector_store %arg7[%c112, %c0_18], %17 {strides = array<i32>} : memref<144x648xbf16, #tpu.memory_space<vmem>>, vector<16x648xbf16>,
    %c0_19 = arith.constant 0 : index
    %c38 = arith.constant 38 : index
    %19 = vector.load %arg1[%c0_19, %c38] : memref<16x768xbf16, #tpu.memory_space<vmem>>, vector<16x648xbf16>
    %c128 = arith.constant 128 : index
    %c0_20 = arith.constant 0 : index
    %20 = vector.load %arg7[%c128, %c0_20] : memref<144x648xbf16, #tpu.memory_space<vmem>>, vector<16x648xbf16>
    tpu.vector_store %arg7[%c128, %c0_20], %19 {strides = array<i32>} : memref<144x648xbf16, #tpu.memory_space<vmem>>, vector<16x648xbf16>,
    %c0_21 = arith.constant 0 : index
    %c0_22 = arith.constant 0 : index
    %21 = vector.load %arg7[%c0_21, %c0_22] : memref<144x648xbf16, #tpu.memory_space<vmem>>, vector<144x648xbf16>
    %c0_23 = arith.constant 0 : index
    %c0_24 = arith.constant 0 : index
    %22 = vector.load %arg3[%c0_23, %c0_24] : memref<16x144xbf16, #tpu.memory_space<vmem>>, vector<16x144xbf16>
    %cst_25 = arith.constant dense<0.000000e+00> : vector<16x648xf32>
    %23 = tpu.matmul %22, %21, %cst_25 {dimension_numbers = #tpu.dot_dimension_numbers<[1], [0], [0], [1], [0, 0, 1, 1], [], []>} : vector<16x144xbf16>, vector<144x648xbf16>, vector<16x648xf32> -> vector<16x648xf32>
    %cst_26 = arith.constant 0.000000e+00 : f32
    %24 = vector.broadcast %cst_26 : f32 to vector<16x648xf32>
    %25 = arith.cmpf oge, %23, %24 : vector<16x648xf32>
    %cst_27 = arith.constant 0.00999999977 : f32
    %26 = vector.broadcast %cst_27 : f32 to vector<16x648xf32>
    %27 = arith.mulf %26, %23 : vector<16x648xf32>
    %28 = arith.select %25, %23, %27 : vector<16x648xi1>, vector<16x648xf32>
    %cst_28 = arith.constant 0.000000e+00 : f32
    %29 = vector.shape_cast %2 : vector<1x648xi1> to vector<1x648xi1>
    %30 = vector.broadcast %29 : vector<1x648xi1> to vector<16x648xi1>
    %31 = vector.broadcast %cst_28 : f32 to vector<16x648xf32>
    %32 = arith.select %30, %28, %31 : vector<16x648xi1>, vector<16x648xf32>
    %33 = arith.truncf %32 : vector<16x648xf32> to vector<16x648xbf16>
    %cst_29 = arith.constant 0.000000e+00 : bf16
    %34 = vector.broadcast %cst_29 : bf16 to vector<16x19xbf16>
    %c0_30 = arith.constant 0 : index
    %c0_31 = arith.constant 0 : index
    %35 = vector.load %arg8[%c0_30, %c0_31] : memref<16x768xbf16, #tpu.memory_space<vmem>>, vector<16x19xbf16>
    tpu.vector_store %arg8[%c0_30, %c0_31], %34 {strides = array<i32>} : memref<16x768xbf16, #tpu.memory_space<vmem>>, vector<16x19xbf16>,
    %c0_32 = arith.constant 0 : index
    %c19_33 = arith.constant 19 : index
    %36 = vector.load %arg8[%c0_32, %c19_33] : memref<16x768xbf16, #tpu.memory_space<vmem>>, vector<16x648xbf16>
    tpu.vector_store %arg8[%c0_32, %c19_33], %33 {strides = array<i32>} : memref<16x768xbf16, #tpu.memory_space<vmem>>, vector<16x648xbf16>,
    %c0_34 = arith.constant 0 : index
    %c0_35 = arith.constant 0 : index
    %37 = vector.load %arg8[%c0_34, %c0_35] : memref<16x768xbf16, #tpu.memory_space<vmem>>, vector<16x648xbf16>
    %c0_36 = arith.constant 0 : index
    %c0_37 = arith.constant 0 : index
    %38 = vector.load %arg7[%c0_36, %c0_37] : memref<144x648xbf16, #tpu.memory_space<vmem>>, vector<16x648xbf16>
    tpu.vector_store %arg7[%c0_36, %c0_37], %37 {strides = array<i32>} : memref<144x648xbf16, #tpu.memory_space<vmem>>, vector<16x648xbf16>,
    %c0_38 = arith.constant 0 : index
    %c1_39 = arith.constant 1 : index
    %39 = vector.load %arg8[%c0_38, %c1_39] : memref<16x768xbf16, #tpu.memory_space<vmem>>, vector<16x648xbf16>
    %c16_40 = arith.constant 16 : index
    %c0_41 = arith.constant 0 : index
    %40 = vector.load %arg7[%c16_40, %c0_41] : memref<144x648xbf16, #tpu.memory_space<vmem>>, vector<16x648xbf16>
    tpu.vector_store %arg7[%c16_40, %c0_41], %39 {strides = array<i32>} : memref<144x648xbf16, #tpu.memory_space<vmem>>, vector<16x648xbf16>,
    %c0_42 = arith.constant 0 : index
    %c2_43 = arith.constant 2 : index
    %41 = vector.load %arg8[%c0_42, %c2_43] : memref<16x768xbf16, #tpu.memory_space<vmem>>, vector<16x648xbf16>
    %c32_44 = arith.constant 32 : index
    %c0_45 = arith.constant 0 : index
    %42 = vector.load %arg7[%c32_44, %c0_45] : memref<144x648xbf16, #tpu.memory_space<vmem>>, vector<16x648xbf16>
    tpu.vector_store %arg7[%c32_44, %c0_45], %41 {strides = array<i32>} : memref<144x648xbf16, #tpu.memory_space<vmem>>, vector<16x648xbf16>,
    %c0_46 = arith.constant 0 : index
    %c18_47 = arith.constant 18 : index
    %43 = vector.load %arg8[%c0_46, %c18_47] : memref<16x768xbf16, #tpu.memory_space<vmem>>, vector<16x648xbf16>
    %c48_48 = arith.constant 48 : index
    %c0_49 = arith.constant 0 : index
    %44 = vector.load %arg7[%c48_48, %c0_49] : memref<144x648xbf16, #tpu.memory_space<vmem>>, vector<16x648xbf16>
    tpu.vector_store %arg7[%c48_48, %c0_49], %43 {strides = array<i32>} : memref<144x648xbf16, #tpu.memory_space<vmem>>, vector<16x648xbf16>,
    %c0_50 = arith.constant 0 : index
    %c19_51 = arith.constant 19 : index
    %45 = vector.load %arg8[%c0_50, %c19_51] : memref<16x768xbf16, #tpu.memory_space<vmem>>, vector<16x648xbf16>
    %c64_52 = arith.constant 64 : index
    %c0_53 = arith.constant 0 : index
    %46 = vector.load %arg7[%c64_52, %c0_53] : memref<144x648xbf16, #tpu.memory_space<vmem>>, vector<16x648xbf16>
    tpu.vector_store %arg7[%c64_52, %c0_53], %45 {strides = array<i32>} : memref<144x648xbf16, #tpu.memory_space<vmem>>, vector<16x648xbf16>,
    %c0_54 = arith.constant 0 : index
    %c20_55 = arith.constant 20 : index
    %47 = vector.load %arg8[%c0_54, %c20_55] : memref<16x768xbf16, #tpu.memory_space<vmem>>, vector<16x648xbf16>
    %c80_56 = arith.constant 80 : index
    %c0_57 = arith.constant 0 : index
    %48 = vector.load %arg7[%c80_56, %c0_57] : memref<144x648xbf16, #tpu.memory_space<vmem>>, vector<16x648xbf16>
    tpu.vector_store %arg7[%c80_56, %c0_57], %47 {strides = array<i32>} : memref<144x648xbf16, #tpu.memory_space<vmem>>, vector<16x648xbf16>,
    %c0_58 = arith.constant 0 : index
    %c36_59 = arith.constant 36 : index
    %49 = vector.load %arg8[%c0_58, %c36_59] : memref<16x768xbf16, #tpu.memory_space<vmem>>, vector<16x648xbf16>
    %c96_60 = arith.constant 96 : index
    %c0_61 = arith.constant 0 : index
    %50 = vector.load %arg7[%c96_60, %c0_61] : memref<144x648xbf16, #tpu.memory_space<vmem>>, vector<16x648xbf16>
    tpu.vector_store %arg7[%c96_60, %c0_61], %49 {strides = array<i32>} : memref<144x648xbf16, #tpu.memory_space<vmem>>, vector<16x648xbf16>,
    %c0_62 = arith.constant 0 : index
    %c37_63 = arith.constant 37 : index
    %51 = vector.load %arg8[%c0_62, %c37_63] : memref<16x768xbf16, #tpu.memory_space<vmem>>, vector<16x648xbf16>
    %c112_64 = arith.constant 112 : index
    %c0_65 = arith.constant 0 : index
    %52 = vector.load %arg7[%c112_64, %c0_65] : memref<144x648xbf16, #tpu.memory_space<vmem>>, vector<16x648xbf16>
    tpu.vector_store %arg7[%c112_64, %c0_65], %51 {strides = array<i32>} : memref<144x648xbf16, #tpu.memory_space<vmem>>, vector<16x648xbf16>,
    %c0_66 = arith.constant 0 : index
    %c38_67 = arith.constant 38 : index
    %53 = vector.load %arg8[%c0_66, %c38_67] : memref<16x768xbf16, #tpu.memory_space<vmem>>, vector<16x648xbf16>
    %c128_68 = arith.constant 128 : index
    %c0_69 = arith.constant 0 : index
    %54 = vector.load %arg7[%c128_68, %c0_69] : memref<144x648xbf16, #tpu.memory_space<vmem>>, vector<16x648xbf16>
    tpu.vector_store %arg7[%c128_68, %c0_69], %53 {strides = array<i32>} : memref<144x648xbf16, #tpu.memory_space<vmem>>, vector<16x648xbf16>,
    %c0_70 = arith.constant 0 : index
    %c0_71 = arith.constant 0 : index
    %55 = vector.load %arg7[%c0_70, %c0_71] : memref<144x648xbf16, #tpu.memory_space<vmem>>, vector<144x648xbf16>
    %c0_72 = arith.constant 0 : index
    %c0_73 = arith.constant 0 : index
    %56 = vector.load %arg4[%c0_72, %c0_73] : memref<8x144xbf16, #tpu.memory_space<vmem>>, vector<8x144xbf16>
    %cst_74 = arith.constant dense<0.000000e+00> : vector<8x648xf32>
    %57 = tpu.matmul %56, %55, %cst_74 {dimension_numbers = #tpu.dot_dimension_numbers<[1], [0], [0], [1], [0, 0, 1, 1], [], []>} : vector<8x144xbf16>, vector<144x648xbf16>, vector<8x648xf32> -> vector<8x648xf32>
    %cst_75 = arith.constant 0.000000e+00 : f32
    %58 = vector.broadcast %cst_75 : f32 to vector<8x648xf32>
    %59 = arith.cmpf oge, %57, %58 : vector<8x648xf32>
    %cst_76 = arith.constant 0.00999999977 : f32
    %60 = vector.broadcast %cst_76 : f32 to vector<8x648xf32>
    %61 = arith.mulf %60, %57 : vector<8x648xf32>
    %62 = arith.select %59, %57, %61 : vector<8x648xi1>, vector<8x648xf32>
    %cst_77 = arith.constant 0.000000e+00 : f32
    %63 = vector.shape_cast %2 : vector<1x648xi1> to vector<1x648xi1>
    %64 = vector.broadcast %63 : vector<1x648xi1> to vector<8x648xi1>
    %65 = vector.broadcast %cst_77 : f32 to vector<8x648xf32>
    %66 = arith.select %64, %62, %65 : vector<8x648xi1>, vector<8x648xf32>
    %67 = arith.truncf %66 : vector<8x648xf32> to vector<8x648xbf16>
    %cst_78 = arith.constant 0.000000e+00 : bf16
    %68 = vector.broadcast %cst_78 : bf16 to vector<8x19xbf16>
    %c0_79 = arith.constant 0 : index
    %c0_80 = arith.constant 0 : index
    %69 = vector.load %arg9[%c0_79, %c0_80] : memref<8x768xbf16, #tpu.memory_space<vmem>>, vector<8x19xbf16>
    tpu.vector_store %arg9[%c0_79, %c0_80], %68 {strides = array<i32>} : memref<8x768xbf16, #tpu.memory_space<vmem>>, vector<8x19xbf16>,
    %c0_81 = arith.constant 0 : index
    %c19_82 = arith.constant 19 : index
    %70 = vector.load %arg9[%c0_81, %c19_82] : memref<8x768xbf16, #tpu.memory_space<vmem>>, vector<8x648xbf16>
    tpu.vector_store %arg9[%c0_81, %c19_82], %67 {strides = array<i32>} : memref<8x768xbf16, #tpu.memory_space<vmem>>, vector<8x648xbf16>,
    %c0_83 = arith.constant 0 : index
    %c0_84 = arith.constant 0 : index
    %71 = vector.load %arg9[%c0_83, %c0_84] : memref<8x768xbf16, #tpu.memory_space<vmem>>, vector<8x648xbf16>
    %c0_85 = arith.constant 0 : index
    %c0_86 = arith.constant 0 : index
    %72 = vector.load %arg7[%c0_85, %c0_86] : memref<144x648xbf16, #tpu.memory_space<vmem>>, vector<8x648xbf16>
    tpu.vector_store %arg7[%c0_85, %c0_86], %71 {strides = array<i32>} : memref<144x648xbf16, #tpu.memory_space<vmem>>, vector<8x648xbf16>,
    %c0_87 = arith.constant 0 : index
    %c1_88 = arith.constant 1 : index
    %73 = vector.load %arg9[%c0_87, %c1_88] : memref<8x768xbf16, #tpu.memory_space<vmem>>, vector<8x648xbf16>
    %c8 = arith.constant 8 : index
    %c0_89 = arith.constant 0 : index
    %74 = vector.load %arg7[%c8, %c0_89] : memref<144x648xbf16, #tpu.memory_space<vmem>>, vector<8x648xbf16>
    tpu.vector_store %arg7[%c8, %c0_89], %73 {strides = array<i32>} : memref<144x648xbf16, #tpu.memory_space<vmem>>, vector<8x648xbf16>,
    %c0_90 = arith.constant 0 : index
    %c2_91 = arith.constant 2 : index
    %75 = vector.load %arg9[%c0_90, %c2_91] : memref<8x768xbf16, #tpu.memory_space<vmem>>, vector<8x648xbf16>
    %c16_92 = arith.constant 16 : index
    %c0_93 = arith.constant 0 : index
    %76 = vector.load %arg7[%c16_92, %c0_93] : memref<144x648xbf16, #tpu.memory_space<vmem>>, vector<8x648xbf16>
    tpu.vector_store %arg7[%c16_92, %c0_93], %75 {strides = array<i32>} : memref<144x648xbf16, #tpu.memory_space<vmem>>, vector<8x648xbf16>,
    %c0_94 = arith.constant 0 : index
    %c18_95 = arith.constant 18 : index
    %77 = vector.load %arg9[%c0_94, %c18_95] : memref<8x768xbf16, #tpu.memory_space<vmem>>, vector<8x648xbf16>
    %c24 = arith.constant 24 : index
    %c0_96 = arith.constant 0 : index
    %78 = vector.load %arg7[%c24, %c0_96] : memref<144x648xbf16, #tpu.memory_space<vmem>>, vector<8x648xbf16>
    tpu.vector_store %arg7[%c24, %c0_96], %77 {strides = array<i32>} : memref<144x648xbf16, #tpu.memory_space<vmem>>, vector<8x648xbf16>,
    %c0_97 = arith.constant 0 : index
    %c19_98 = arith.constant 19 : index
    %79 = vector.load %arg9[%c0_97, %c19_98] : memref<8x768xbf16, #tpu.memory_space<vmem>>, vector<8x648xbf16>
    %c32_99 = arith.constant 32 : index
    %c0_100 = arith.constant 0 : index
    %80 = vector.load %arg7[%c32_99, %c0_100] : memref<144x648xbf16, #tpu.memory_space<vmem>>, vector<8x648xbf16>
    tpu.vector_store %arg7[%c32_99, %c0_100], %79 {strides = array<i32>} : memref<144x648xbf16, #tpu.memory_space<vmem>>, vector<8x648xbf16>,
    %c0_101 = arith.constant 0 : index
    %c20_102 = arith.constant 20 : index
    %81 = vector.load %arg9[%c0_101, %c20_102] : memref<8x768xbf16, #tpu.memory_space<vmem>>, vector<8x648xbf16>
    %c40 = arith.constant 40 : index
    %c0_103 = arith.constant 0 : index
    %82 = vector.load %arg7[%c40, %c0_103] : memref<144x648xbf16, #tpu.memory_space<vmem>>, vector<8x648xbf16>
    tpu.vector_store %arg7[%c40, %c0_103], %81 {strides = array<i32>} : memref<144x648xbf16, #tpu.memory_space<vmem>>, vector<8x648xbf16>,
    %c0_104 = arith.constant 0 : index
    %c36_105 = arith.constant 36 : index
    %83 = vector.load %arg9[%c0_104, %c36_105] : memref<8x768xbf16, #tpu.memory_space<vmem>>, vector<8x648xbf16>
    %c48_106 = arith.constant 48 : index
    %c0_107 = arith.constant 0 : index
    %84 = vector.load %arg7[%c48_106, %c0_107] : memref<144x648xbf16, #tpu.memory_space<vmem>>, vector<8x648xbf16>
    tpu.vector_store %arg7[%c48_106, %c0_107], %83 {strides = array<i32>} : memref<144x648xbf16, #tpu.memory_space<vmem>>, vector<8x648xbf16>,
    %c0_108 = arith.constant 0 : index
    %c37_109 = arith.constant 37 : index
    %85 = vector.load %arg9[%c0_108, %c37_109] : memref<8x768xbf16, #tpu.memory_space<vmem>>, vector<8x648xbf16>
    %c56 = arith.constant 56 : index
    %c0_110 = arith.constant 0 : index
    %86 = vector.load %arg7[%c56, %c0_110] : memref<144x648xbf16, #tpu.memory_space<vmem>>, vector<8x648xbf16>
    tpu.vector_store %arg7[%c56, %c0_110], %85 {strides = array<i32>} : memref<144x648xbf16, #tpu.memory_space<vmem>>, vector<8x648xbf16>,
    %c0_111 = arith.constant 0 : index
    %c38_112 = arith.constant 38 : index
    %87 = vector.load %arg9[%c0_111, %c38_112] : memref<8x768xbf16, #tpu.memory_space<vmem>>, vector<8x648xbf16>
    %c64_113 = arith.constant 64 : index
    %c0_114 = arith.constant 0 : index
    %88 = vector.load %arg7[%c64_113, %c0_114] : memref<144x648xbf16, #tpu.memory_space<vmem>>, vector<8x648xbf16>
    tpu.vector_store %arg7[%c64_113, %c0_114], %87 {strides = array<i32>} : memref<144x648xbf16, #tpu.memory_space<vmem>>, vector<8x648xbf16>,
    %c0_115 = arith.constant 0 : index
    %c0_116 = arith.constant 0 : index
    %89 = vector.load %arg7[%c0_115, %c0_116] : memref<144x648xbf16, #tpu.memory_space<vmem>>, vector<72x648xbf16>
    %c0_117 = arith.constant 0 : index
    %c0_118 = arith.constant 0 : index
    %90 = vector.load %arg5[%c0_117, %c0_118] : memref<8x72xbf16, #tpu.memory_space<vmem>>, vector<8x72xbf16>
    %cst_119 = arith.constant dense<0.000000e+00> : vector<8x648xf32>
    %91 = tpu.matmul %90, %89, %cst_119 {dimension_numbers = #tpu.dot_dimension_numbers<[1], [0], [0], [1], [0, 0, 1, 1], [], []>} : vector<8x72xbf16>, vector<72x648xbf16>, vector<8x648xf32> -> vector<8x648xf32>
    %cst_120 = arith.constant 0.000000e+00 : f32
    %92 = vector.shape_cast %2 : vector<1x648xi1> to vector<1x648xi1>
    %93 = vector.broadcast %92 : vector<1x648xi1> to vector<8x648xi1>
    %94 = vector.broadcast %cst_120 : f32 to vector<8x648xf32>
    %95 = arith.select %93, %91, %94 : vector<8x648xi1>, vector<8x648xf32>
    %c0_121 = arith.constant 0 : index
    %c0_122 = arith.constant 0 : index
    %96 = vector.load %arg6[%c0_121, %c0_122] : memref<8x648xf32, #tpu.memory_space<vmem>>, vector<8x648xf32>
    tpu.vector_store %arg6[%c0_121, %c0_122], %95 {strides = array<i32>} : memref<8x648xf32, #tpu.memory_space<vmem>>, vector<8x648xf32>,
    return
  }
  func.func @transform_0(%arg0: i32) -> (i32, i32) {
    %c0_i32 = arith.constant 0 : i32
    %c0_i32_0 = arith.constant 0 : i32
    %c0_i32_1 = arith.constant 0 : i32
    return %c0_i32, %c0_i32_0 : i32, i32
  }
  func.func @transform_1(%arg0: i32) -> (i32, i32) {
    %c0_i32 = arith.constant 0 : i32
    %c0_i32_0 = arith.constant 0 : i32
    %c0_i32_1 = arith.constant 0 : i32
    return %c0_i32, %c0_i32_0 : i32, i32
  }
  func.func @transform_2(%arg0: i32) -> (i32, i32) {
    %c0_i32 = arith.constant 0 : i32
    %c0_i32_0 = arith.constant 0 : i32
    %c0_i32_1 = arith.constant 0 : i32
    return %c0_i32, %c0_i32_0 : i32, i32
  }
  func.func @transform_3(%arg0: i32) -> (i32, i32) {
    %c0_i32 = arith.constant 0 : i32
    %c0_i32_0 = arith.constant 0 : i32
    %c0_i32_1 = arith.constant 0 : i32
    return %c0_i32, %c0_i32_0 : i32, i32
  }
  func.func @transform_4(%arg0: i32) -> (i32, i32) {
    %c0_i32 = arith.constant 0 : i32
    %c0_i32_0 = arith.constant 0 : i32
    %c0_i32_1 = arith.constant 0 : i32
    return %c0_i32, %c0_i32_0 : i32, i32
  }
  func.func @transform_5(%arg0: i32) -> (i32, i32) {
    %c0_i32 = arith.constant 0 : i32
    %c0_i32_0 = arith.constant 0 : i32
    %c0_i32_1 = arith.constant 0 : i32
    return %c0_i32, %c0_i32_0 : i32, i32
  }
}

</mosaic_0001>

<llo_original>
// kernel: output_cv_block_forward.1
$region0: #{output_cv_block_forward.1}
  #allocation0 [shape = 'u32[]', space=smem, size = 0x4, offset = 0x4, fixed_abs, tag = 'smem constant byte address 0x4 - core index']
  #allocation1 [shape = 'u32[144,128]{1,0:T(1,128)}', space=vmem, size = 0x12000, scoped, tag = 'internal scratch']
  #allocation2 [shape = 'bf16[144,648]{1,0:T(8,128)(2,1)}', space=vmem, size = 0x36000, scoped, tag = 'scratch operand']
  #allocation3 [shape = 'bf16[16,768]{1,0:T(8,128)(2,1)}', space=vmem, size = 0x6000, scoped, tag = 'scratch operand']
  #allocation4 [shape = 'bf16[8,768]{1,0:T(8,128)(2,1)}', space=vmem, size = 0x3000, scoped, tag = 'scratch operand']
  %s0 = inlined_call_operand.vmem [shape: bf16[16,768], index: 0, kind: input, shape index: {}]
  %s1 = inlined_call_operand.vmem [shape: f32[1,648], index: 1, kind: input, shape index: {}]
  %s2 = inlined_call_operand.vmem [shape: bf16[16,144], index: 2, kind: input, shape index: {}]
  %s3 = inlined_call_operand.vmem [shape: bf16[8,144], index: 3, kind: input, shape index: {}]
  %s4 = inlined_call_operand.vmem [shape: bf16[8,72], index: 4, kind: input, shape index: {}]
  %s5 = inlined_call_operand.vmem [shape: f32[8,648], index: 5, kind: output, shape index: {}]
  %s6 = sld [smem:[#allocation0]]
  $region30: #{output_cv_block_forward.1} parent=0
    _
  %s8 = ssub.s32 1, %s6
  %s9 = scalar_select 0, %s8, %s6
  // Predicated region
  $region2: #{output_cv_block_forward.1} parent=0 // pred_check
    _
  $region3: #{output_cv_block_forward.1} parent=0 // pred_check_branch
    %11 = sbr.rel (0) target = $region5
  $region4: #{output_cv_block_forward.1} parent=0 // pred_region
    _
  $region5: #{output_cv_block_forward.1} parent=0 // pred_fallthru
    _
  // Predicated region
  $region6: #{output_cv_block_forward.1} parent=0 // pred_check
    _
  $region7: #{output_cv_block_forward.1} parent=0 // pred_check_branch
    %13 = sbr.rel (0) target = $region9
  $region8: #{output_cv_block_forward.1} parent=0 // pred_region
    _
  $region9: #{output_cv_block_forward.1} parent=0 // pred_fallthru
    _
  // Predicated region
  $region10: #{output_cv_block_forward.1} parent=0 // pred_check
    _
  $region11: #{output_cv_block_forward.1} parent=0 // pred_check_branch
    %15 = sbr.rel (0) target = $region13
  $region12: #{output_cv_block_forward.1} parent=0 // pred_region
    _
  $region13: #{output_cv_block_forward.1} parent=0 // pred_fallthru
    _
  // Predicated region
  $region14: #{output_cv_block_forward.1} parent=0 // pred_check
    _
  $region15: #{output_cv_block_forward.1} parent=0 // pred_check_branch
    %17 = sbr.rel (0) target = $region17
  $region16: #{output_cv_block_forward.1} parent=0 // pred_region
    _
  $region17: #{output_cv_block_forward.1} parent=0 // pred_fallthru
    _
  // Predicated region
  $region18: #{output_cv_block_forward.1} parent=0 // pred_check
    _
  $region19: #{output_cv_block_forward.1} parent=0 // pred_check_branch
    %19 = sbr.rel (0) target = $region21
  $region20: #{output_cv_block_forward.1} parent=0 // pred_region
    _
  $region21: #{output_cv_block_forward.1} parent=0 // pred_fallthru
    _
  %v21 = vld [vmem:[%s1] sm:$0x3f]
  %vm22 = vcmp.gt.f32.partialorder %v21, 0.5
  %v23 = vld [vmem:[%s0] sm:$0xff]
  %v24 = vld [vmem:[%s0 + $0x8] sm:$0xff]
  %v25 = vld [vmem:[%s0 + $0x10] sm:$0xff]
  %v26 = vld [vmem:[%s0 + $0x18] sm:$0xff]
  %v27 = vld [vmem:[%s0 + $0x20] sm:$0xff]
  %v28 = vld [vmem:[%s0 + $0x28] sm:$0xff]
  %29 = vst [vmem:[#allocation2] sm:$0xff] %v23
  %30 = vst [vmem:[#allocation2 + $0x8] sm:$0xff] %v24
  %vm31 = vcmask 1043456
  %vm32 = vcmask 64516
  %vm33 = vmor %vm32, %vm31
  %34 = vst.msk [vmem:[#allocation2 + $0x10] sm:$0xff] %vm33, %v25
  %35 = vst [vmem:[#allocation2 + $0x18] sm:$0xff] %v26
  %36 = vst [vmem:[#allocation2 + $0x20] sm:$0xff] %v27
  %37 = vst.msk [vmem:[#allocation2 + $0x28] sm:$0xff] %vm33, %v28
  %v38 = vld [vmem:[%s0] sm:$0xff]
  %v39 = vld [vmem:[%s0 + $0x8] sm:$0xff]
  %v40 = vld [vmem:[%s0 + $0x10] sm:$0xff]
  %v41 = vld [vmem:[%s0 + $0x18] sm:$0xff]
  %v42 = vld [vmem:[%s0 + $0x20] sm:$0xff]
  %v43 = vld [vmem:[%s0 + $0x28] sm:$0xff]
  %50 = vrot.lane.b32.xlu0 %v38, 127
  %v51 = vpop.permute.xlu0 %50
  %52 = vrot.lane.b32.xlu0 %v39, 127
  %v53 = vpop.permute.xlu0 %52
  %54 = vrot.lane.b32.xlu0 %v40, 127
  %v55 = vpop.permute.xlu0 %54
  %56 = vrot.lane.b32.xlu0 %v41, 127
  %v57 = vpop.permute.xlu0 %56
  %58 = vrot.lane.b32.xlu0 %v42, 127
  %v59 = vpop.permute.xlu0 %58
  %60 = vrot.lane.b32.xlu0 %v43, 127
  %v61 = vpop.permute.xlu0 %60
  %v62 = vrot.slane %v51, 4
  %v63 = vrot.slane %v53, 4
  %v64 = vrot.slane %v55, 4
  %v65 = vrot.slane %v57, 4
  %v66 = vrot.slane %v59, 4
  %v67 = vrot.slane %v61, 4
  %vm68 = vcmask 1043456
  %v69 = vsel %vm68, %v62, %v63
  %vm70 = vcmask 1039360
  %v71 = vsel %vm70, %v51, %v69
  %v72 = vsel %vm68, %v63, %v64
  %v73 = vsel %vm70, %v53, %v72
  %v74 = vsel %vm70, %v55, %v64
  %v75 = vsel %vm68, %v65, %v66
  %v76 = vsel %vm70, %v57, %v75
  %v77 = vsel %vm68, %v66, %v67
  %v78 = vsel %vm70, %v59, %v77
  %v79 = vsel %vm70, %v61, %v67
  %86 = vst [vmem:[#allocation2 + $0x30] sm:$0xff] %v71
  %87 = vst [vmem:[#allocation2 + $0x38] sm:$0xff] %v73
  %88 = vst.msk [vmem:[#allocation2 + $0x40] sm:$0xff] %vm33, %v74
  %89 = vst [vmem:[#allocation2 + $0x48] sm:$0xff] %v76
  %90 = vst [vmem:[#allocation2 + $0x50] sm:$0xff] %v78
  %91 = vst.msk [vmem:[#allocation2 + $0x58] sm:$0xff] %vm33, %v79
  %v92 = vld [vmem:[%s0] sm:$0xff]
  %v93 = vld [vmem:[%s0 + $0x8] sm:$0xff]
  %v94 = vld [vmem:[%s0 + $0x10] sm:$0xff]
  %v95 = vld [vmem:[%s0 + $0x18] sm:$0xff]
  %v96 = vld [vmem:[%s0 + $0x20] sm:$0xff]
  %v97 = vld [vmem:[%s0 + $0x28] sm:$0xff]
  %104 = vrot.lane.b32.xlu0 %v92, 126
  %v105 = vpop.permute.xlu0 %104
  %106 = vrot.lane.b32.xlu0 %v93, 126
  %v107 = vpop.permute.xlu0 %106
  %108 = vrot.lane.b32.xlu0 %v94, 126
  %v109 = vpop.permute.xlu0 %108
  %110 = vrot.lane.b32.xlu0 %v95, 126
  %v111 = vpop.permute.xlu0 %110
  %112 = vrot.lane.b32.xlu0 %v96, 126
  %v113 = vpop.permute.xlu0 %112
  %114 = vrot.lane.b32.xlu0 %v97, 126
  %v115 = vpop.permute.xlu0 %114
  %v116 = vrot.slane %v105, 4
  %v117 = vrot.slane %v107, 4
  %v118 = vrot.slane %v109, 4
  %v119 = vrot.slane %v111, 4
  %v120 = vrot.slane %v113, 4
  %v121 = vrot.slane %v115, 4
  %v122 = vsel %vm68, %v116, %v117
  %vm123 = vcmask 1031168
  %v124 = vsel %vm123, %v105, %v122
  %v125 = vsel %vm68, %v117, %v118
  %v126 = vsel %vm123, %v107, %v125
  %v127 = vsel %vm123, %v109, %v118
  %v128 = vsel %vm68, %v119, %v120
  %v129 = vsel %vm123, %v111, %v128
  %v130 = vsel %vm68, %v120, %v121
  %v131 = vsel %vm123, %v113, %v130
  %v132 = vsel %vm123, %v115, %v121
  %139 = vst [vmem:[#allocation2 + $0x60] sm:$0xff] %v124
  %140 = vst [vmem:[#allocation2 + $0x68] sm:$0xff] %v126
  %141 = vst.msk [vmem:[#allocation2 + $0x70] sm:$0xff] %vm33, %v127
  %142 = vst [vmem:[#allocation2 + $0x78] sm:$0xff] %v129
  %143 = vst [vmem:[#allocation2 + $0x80] sm:$0xff] %v131
  %144 = vst.msk [vmem:[#allocation2 + $0x88] sm:$0xff] %vm33, %v132
  %v145 = vld [vmem:[%s0] sm:$0xff]
  %v146 = vld [vmem:[%s0 + $0x8] sm:$0xff]
  %v147 = vld [vmem:[%s0 + $0x10] sm:$0xff]
  %v148 = vld [vmem:[%s0 + $0x18] sm:$0xff]
  %v149 = vld [vmem:[%s0 + $0x20] sm:$0xff]
  %v150 = vld [vmem:[%s0 + $0x28] sm:$0xff]
  %157 = vrot.lane.b32.xlu0 %v145, 110
  %v158 = vpop.permute.xlu0 %157
  %159 = vrot.lane.b32.xlu0 %v146, 110
  %v160 = vpop.permute.xlu0 %159
  %161 = vrot.lane.b32.xlu0 %v147, 110
  %v162 = vpop.permute.xlu0 %161
  %163 = vrot.lane.b32.xlu0 %v148, 110
  %v164 = vpop.permute.xlu0 %163
  %165 = vrot.lane.b32.xlu0 %v149, 110
  %v166 = vpop.permute.xlu0 %165
  %167 = vrot.lane.b32.xlu0 %v150, 110
  %v168 = vpop.permute.xlu0 %167
  %v169 = vrot.slane %v158, 4
  %v170 = vrot.slane %v160, 4
  %v171 = vrot.slane %v162, 4
  %v172 = vrot.slane %v164, 4
  %v173 = vrot.slane %v166, 4
  %v174 = vrot.slane %v168, 4
  %v175 = vsel %vm68, %v169, %v170
  %vm176 = vcmask 900096
  %v177 = vsel %vm176, %v158, %v175
  %v178 = vsel %vm68, %v170, %v171
  %v179 = vsel %vm176, %v160, %v178
  %v180 = vsel %vm176, %v162, %v171
  %v181 = vsel %vm68, %v172, %v173
  %v182 = vsel %vm176, %v164, %v181
  %v183 = vsel %vm68, %v173, %v174
  %v184 = vsel %vm176, %v166, %v183
  %v185 = vsel %vm176, %v168, %v174
  %192 = vst [vmem:[#allocation2 + $0x90] sm:$0xff] %v177
  %193 = vst [vmem:[#allocation2 + $0x98] sm:$0xff] %v179
  %194 = vst.msk [vmem:[#allocation2 + $0xa0] sm:$0xff] %vm33, %v180
  %195 = vst [vmem:[#allocation2 + $0xa8] sm:$0xff] %v182
  %196 = vst [vmem:[#allocation2 + $0xb0] sm:$0xff] %v184
  %197 = vst.msk [vmem:[#allocation2 + $0xb8] sm:$0xff] %vm33, %v185
  %v198 = vld [vmem:[%s0] sm:$0xff]
  %v199 = vld [vmem:[%s0 + $0x8] sm:$0xff]
  %v200 = vld [vmem:[%s0 + $0x10] sm:$0xff]
  %v201 = vld [vmem:[%s0 + $0x18] sm:$0xff]
  %v202 = vld [vmem:[%s0 + $0x20] sm:$0xff]
  %v203 = vld [vmem:[%s0 + $0x28] sm:$0xff]
  %210 = vrot.lane.b32.xlu0 %v198, 109
  %v211 = vpop.permute.xlu0 %210
  %212 = vrot.lane.b32.xlu0 %v199, 109
  %v213 = vpop.permute.xlu0 %212
  %214 = vrot.lane.b32.xlu0 %v200, 109
  %v215 = vpop.permute.xlu0 %214
  %216 = vrot.lane.b32.xlu0 %v201, 109
  %v217 = vpop.permute.xlu0 %216
  %218 = vrot.lane.b32.xlu0 %v202, 109
  %v219 = vpop.permute.xlu0 %218
  %220 = vrot.lane.b32.xlu0 %v203, 109
  %v221 = vpop.permute.xlu0 %220
  %v222 = vrot.slane %v211, 4
  %v223 = vrot.slane %v213, 4
  %v224 = vrot.slane %v215, 4
  %v225 = vrot.slane %v217, 4
  %v226 = vrot.slane %v219, 4
  %v227 = vrot.slane %v221, 4
  %v228 = vsel %vm68, %v222, %v223
  %vm229 = vcmask 891904
  %v230 = vsel %vm229, %v211, %v228
  %v231 = vsel %vm68, %v223, %v224
  %v232 = vsel %vm229, %v213, %v231
  %v233 = vsel %vm229, %v215, %v224
  %v234 = vsel %vm68, %v225, %v226
  %v235 = vsel %vm229, %v217, %v234
  %v236 = vsel %vm68, %v226, %v227
  %v237 = vsel %vm229, %v219, %v236
  %v238 = vsel %vm229, %v221, %v227
  %245 = vst [vmem:[#allocation2 + $0xc0] sm:$0xff] %v230
  %246 = vst [vmem:[#allocation2 + $0xc8] sm:$0xff] %v232
  %247 = vst.msk [vmem:[#allocation2 + $0xd0] sm:$0xff] %vm33, %v233
  %248 = vst [vmem:[#allocation2 + $0xd8] sm:$0xff] %v235
  %249 = vst [vmem:[#allocation2 + $0xe0] sm:$0xff] %v237
  %250 = vst.msk [vmem:[#allocation2 + $0xe8] sm:$0xff] %vm33, %v238
  %v251 = vld [vmem:[%s0] sm:$0xff]
  %v252 = vld [vmem:[%s0 + $0x8] sm:$0xff]
  %v253 = vld [vmem:[%s0 + $0x10] sm:$0xff]
  %v254 = vld [vmem:[%s0 + $0x18] sm:$0xff]
  %v255 = vld [vmem:[%s0 + $0x20] sm:$0xff]
  %v256 = vld [vmem:[%s0 + $0x28] sm:$0xff]
  %263 = vrot.lane.b32.xlu0 %v251, 108
  %v264 = vpop.permute.xlu0 %263
  %265 = vrot.lane.b32.xlu0 %v252, 108
  %v266 = vpop.permute.xlu0 %265
  %267 = vrot.lane.b32.xlu0 %v253, 108
  %v268 = vpop.permute.xlu0 %267
  %269 = vrot.lane.b32.xlu0 %v254, 108
  %v270 = vpop.permute.xlu0 %269
  %271 = vrot.lane.b32.xlu0 %v255, 108
  %v272 = vpop.permute.xlu0 %271
  %273 = vrot.lane.b32.xlu0 %v256, 108
  %v274 = vpop.permute.xlu0 %273
  %v275 = vrot.slane %v264, 4
  %v276 = vrot.slane %v266, 4
  %v277 = vrot.slane %v268, 4
  %v278 = vrot.slane %v270, 4
  %v279 = vrot.slane %v272, 4
  %v280 = vrot.slane %v274, 4
  %v281 = vsel %vm68, %v275, %v276
  %vm282 = vcmask 883712
  %v283 = vsel %vm282, %v264, %v281
  %v284 = vsel %vm68, %v276, %v277
  %v285 = vsel %vm282, %v266, %v284
  %v286 = vsel %vm282, %v268, %v277
  %v287 = vsel %vm68, %v278, %v279
  %v288 = vsel %vm282, %v270, %v287
  %v289 = vsel %vm68, %v279, %v280
  %v290 = vsel %vm282, %v272, %v289
  %v291 = vsel %vm282, %v274, %v280
  %298 = vst [vmem:[#allocation2 + $0xf0] sm:$0xff] %v283
  %299 = vst [vmem:[#allocation2 + $0xf8] sm:$0xff] %v285
  %300 = vst.msk [vmem:[#allocation2 + $0x100] sm:$0xff] %vm33, %v286
  %301 = vst [vmem:[#allocation2 + $0x108] sm:$0xff] %v288
  %302 = vst [vmem:[#allocation2 + $0x110] sm:$0xff] %v290
  %303 = vst.msk [vmem:[#allocation2 + $0x118] sm:$0xff] %vm33, %v291
  %v304 = vld [vmem:[%s0] sm:$0xff]
  %v305 = vld [vmem:[%s0 + $0x8] sm:$0xff]
  %v306 = vld [vmem:[%s0 + $0x10] sm:$0xff]
  %v307 = vld [vmem:[%s0 + $0x18] sm:$0xff]
  %v308 = vld [vmem:[%s0 + $0x20] sm:$0xff]
  %v309 = vld [vmem:[%s0 + $0x28] sm:$0xff]
  %316 = vrot.lane.b32.xlu0 %v304, 92
  %v317 = vpop.permute.xlu0 %316
  %318 = vrot.lane.b32.xlu0 %v305, 92
  %v319 = vpop.permute.xlu0 %318
  %320 = vrot.lane.b32.xlu0 %v306, 92
  %v321 = vpop.permute.xlu0 %320
  %322 = vrot.lane.b32.xlu0 %v307, 92
  %v323 = vpop.permute.xlu0 %322
  %324 = vrot.lane.b32.xlu0 %v308, 92
  %v325 = vpop.permute.xlu0 %324
  %326 = vrot.lane.b32.xlu0 %v309, 92
  %v327 = vpop.permute.xlu0 %326
  %v328 = vrot.slane %v317, 4
  %v329 = vrot.slane %v319, 4
  %v330 = vrot.slane %v321, 4
  %v331 = vrot.slane %v323, 4
  %v332 = vrot.slane %v325, 4
  %v333 = vrot.slane %v327, 4
  %v334 = vsel %vm68, %v328, %v329
  %vm335 = vcmask 752640
  %v336 = vsel %vm335, %v317, %v334
  %v337 = vsel %vm68, %v329, %v330
  %v338 = vsel %vm335, %v319, %v337
  %v339 = vsel %vm335, %v321, %v330
  %v340 = vsel %vm68, %v331, %v332
  %v341 = vsel %vm335, %v323, %v340
  %v342 = vsel %vm68, %v332, %v333
  %v343 = vsel %vm335, %v325, %v342
  %v344 = vsel %vm335, %v327, %v333
  %351 = vst [vmem:[#allocation2 + $0x120] sm:$0xff] %v336
  %352 = vst [vmem:[#allocation2 + $0x128] sm:$0xff] %v338
  %353 = vst.msk [vmem:[#allocation2 + $0x130] sm:$0xff] %vm33, %v339
  %354 = vst [vmem:[#allocation2 + $0x138] sm:$0xff] %v341
  %355 = vst [vmem:[#allocation2 + $0x140] sm:$0xff] %v343
  %356 = vst.msk [vmem:[#allocation2 + $0x148] sm:$0xff] %vm33, %v344
  %v357 = vld [vmem:[%s0] sm:$0xff]
  %v358 = vld [vmem:[%s0 + $0x8] sm:$0xff]
  %v359 = vld [vmem:[%s0 + $0x10] sm:$0xff]
  %v360 = vld [vmem:[%s0 + $0x18] sm:$0xff]
  %v361 = vld [vmem:[%s0 + $0x20] sm:$0xff]
  %v362 = vld [vmem:[%s0 + $0x28] sm:$0xff]
  %369 = vrot.lane.b32.xlu0 %v357, 91
  %v370 = vpop.permute.xlu0 %369
  %371 = vrot.lane.b32.xlu0 %v358, 91
  %v372 = vpop.permute.xlu0 %371
  %373 = vrot.lane.b32.xlu0 %v359, 91
  %v374 = vpop.permute.xlu0 %373
  %375 = vrot.lane.b32.xlu0 %v360, 91
  %v376 = vpop.permute.xlu0 %375
  %377 = vrot.lane.b32.xlu0 %v361, 91
  %v378 = vpop.permute.xlu0 %377
  %379 = vrot.lane.b32.xlu0 %v362, 91
  %v380 = vpop.permute.xlu0 %379
  %v381 = vrot.slane %v370, 4
  %v382 = vrot.slane %v372, 4
  %v383 = vrot.slane %v374, 4
  %v384 = vrot.slane %v376, 4
  %v385 = vrot.slane %v378, 4
  %v386 = vrot.slane %v380, 4
  %v387 = vsel %vm68, %v381, %v382
  %vm388 = vcmask 744448
  %v389 = vsel %vm388, %v370, %v387
  %v390 = vsel %vm68, %v382, %v383
  %v391 = vsel %vm388, %v372, %v390
  %v392 = vsel %vm388, %v374, %v383
  %v393 = vsel %vm68, %v384, %v385
  %v394 = vsel %vm388, %v376, %v393
  %v395 = vsel %vm68, %v385, %v386
  %v396 = vsel %vm388, %v378, %v395
  %v397 = vsel %vm388, %v380, %v386
  %404 = vst [vmem:[#allocation2 + $0x150] sm:$0xff] %v389
  %405 = vst [vmem:[#allocation2 + $0x158] sm:$0xff] %v391
  %406 = vst.msk [vmem:[#allocation2 + $0x160] sm:$0xff] %vm33, %v392
  %407 = vst [vmem:[#allocation2 + $0x168] sm:$0xff] %v394
  %408 = vst [vmem:[#allocation2 + $0x170] sm:$0xff] %v396
  %409 = vst.msk [vmem:[#allocation2 + $0x178] sm:$0xff] %vm33, %v397
  %v410 = vld [vmem:[%s0] sm:$0xff]
  %v411 = vld [vmem:[%s0 + $0x8] sm:$0xff]
  %v412 = vld [vmem:[%s0 + $0x10] sm:$0xff]
  %v413 = vld [vmem:[%s0 + $0x18] sm:$0xff]
  %v414 = vld [vmem:[%s0 + $0x20] sm:$0xff]
  %v415 = vld [vmem:[%s0 + $0x28] sm:$0xff]
  %422 = vrot.lane.b32.xlu0 %v410, 90
  %v423 = vpop.permute.xlu0 %422
  %424 = vrot.lane.b32.xlu0 %v411, 90
  %v425 = vpop.permute.xlu0 %424
  %426 = vrot.lane.b32.xlu0 %v412, 90
  %v427 = vpop.permute.xlu0 %426
  %428 = vrot.lane.b32.xlu0 %v413, 90
  %v429 = vpop.permute.xlu0 %428
  %430 = vrot.lane.b32.xlu0 %v414, 90
  %v431 = vpop.permute.xlu0 %430
  %432 = vrot.lane.b32.xlu0 %v415, 90
  %v433 = vpop.permute.xlu0 %432
  %v434 = vrot.slane %v423, 4
  %v435 = vrot.slane %v425, 4
  %v436 = vrot.slane %v427, 4
  %v437 = vrot.slane %v429, 4
  %v438 = vrot.slane %v431, 4
  %v439 = vrot.slane %v433, 4
  %v440 = vsel %vm68, %v434, %v435
  %vm441 = vcmask 736256
  %v442 = vsel %vm441, %v423, %v440
  %v443 = vsel %vm68, %v435, %v436
  %v444 = vsel %vm441, %v425, %v443
  %v445 = vsel %vm441, %v427, %v436
  %v446 = vsel %vm68, %v437, %v438
  %v447 = vsel %vm441, %v429, %v446
  %v448 = vsel %vm68, %v438, %v439
  %v449 = vsel %vm441, %v431, %v448
  %v450 = vsel %vm441, %v433, %v439
  %457 = vst [vmem:[#allocation2 + $0x180] sm:$0xff] %v442
  %458 = vst [vmem:[#allocation2 + $0x188] sm:$0xff] %v444
  %459 = vst.msk [vmem:[#allocation2 + $0x190] sm:$0xff] %vm33, %v445
  %460 = vst [vmem:[#allocation2 + $0x198] sm:$0xff] %v447
  %461 = vst [vmem:[#allocation2 + $0x1a0] sm:$0xff] %v449
  %462 = vst.msk [vmem:[#allocation2 + $0x1a8] sm:$0xff] %vm33, %v450
  %v463 = vld [vmem:[#allocation2] sm:$0xff]
  %v464 = vld [vmem:[#allocation2 + $0x8] sm:$0xff]
  %v465 = vld [vmem:[#allocation2 + $0x10] sm:$0xff]
  %v466 = vld [vmem:[#allocation2 + $0x18] sm:$0xff]
  %v467 = vld [vmem:[#allocation2 + $0x20] sm:$0xff]
  %v468 = vld [vmem:[#allocation2 + $0x28] sm:$0xff]
  %v469 = vld [vmem:[#allocation2 + $0x30] sm:$0xff]
  %v470 = vld [vmem:[#allocation2 + $0x38] sm:$0xff]
  %v471 = vld [vmem:[#allocation2 + $0x40] sm:$0xff]
  %v472 = vld [vmem:[#allocation2 + $0x48] sm:$0xff]
  %v473 = vld [vmem:[#allocation2 + $0x50] sm:$0xff]
  %v474 = vld [vmem:[#allocation2 + $0x58] sm:$0xff]
  %v475 = vld [vmem:[#allocation2 + $0x60] sm:$0xff]
  %v476 = vld [vmem:[#allocation2 + $0x68] sm:$0xff]
  %v477 = vld [vmem:[#allocation2 + $0x70] sm:$0xff]
  %v478 = vld [vmem:[#allocation2 + $0x78] sm:$0xff]
  %v479 = vld [vmem:[#allocation2 + $0x80] sm:$0xff]
  %v480 = vld [vmem:[#allocation2 + $0x88] sm:$0xff]
  %v481 = vld [vmem:[#allocation2 + $0x90] sm:$0xff]
  %v482 = vld [vmem:[#allocation2 + $0x98] sm:$0xff]
  %v483 = vld [vmem:[#allocation2 + $0xa0] sm:$0xff]
  %v484 = vld [vmem:[#allocation2 + $0xa8] sm:$0xff]
  %v485 = vld [vmem:[#allocation2 + $0xb0] sm:$0xff]
  %v486 = vld [vmem:[#allocation2 + $0xb8] sm:$0xff]
  %v487 = vld [vmem:[#allocation2 + $0xc0] sm:$0xff]
  %v488 = vld [vmem:[#allocation2 + $0xc8] sm:$0xff]
  %v489 = vld [vmem:[#allocation2 + $0xd0] sm:$0xff]
  %v490 = vld [vmem:[#allocation2 + $0xd8] sm:$0xff]
  %v491 = vld [vmem:[#allocation2 + $0xe0] sm:$0xff]
  %v492 = vld [vmem:[#allocation2 + $0xe8] sm:$0xff]
  %v493 = vld [vmem:[#allocation2 + $0xf0] sm:$0xff]
  %v494 = vld [vmem:[#allocation2 + $0xf8] sm:$0xff]
  %v495 = vld [vmem:[#allocation2 + $0x100] sm:$0xff]
  %v496 = vld [vmem:[#allocation2 + $0x108] sm:$0xff]
  %v497 = vld [vmem:[#allocation2 + $0x110] sm:$0xff]
  %v498 = vld [vmem:[#allocation2 + $0x118] sm:$0xff]
  %v499 = vld [vmem:[#allocation2 + $0x120] sm:$0xff]
  %v500 = vld [vmem:[#allocation2 + $0x128] sm:$0xff]
  %v501 = vld [vmem:[#allocation2 + $0x130] sm:$0xff]
  %v502 = vld [vmem:[#allocation2 + $0x138] sm:$0xff]
  %v503 = vld [vmem:[#allocation2 + $0x140] sm:$0xff]
  %v504 = vld [vmem:[#allocation2 + $0x148] sm:$0xff]
  %v505 = vld [vmem:[#allocation2 + $0x150] sm:$0xff]
  %v506 = vld [vmem:[#allocation2 + $0x158] sm:$0xff]
  %v507 = vld [vmem:[#allocation2 + $0x160] sm:$0xff]
  %v508 = vld [vmem:[#allocation2 + $0x168] sm:$0xff]
  %v509 = vld [vmem:[#allocation2 + $0x170] sm:$0xff]
  %v510 = vld [vmem:[#allocation2 + $0x178] sm:$0xff]
  %v511 = vld [vmem:[#allocation2 + $0x180] sm:$0xff]
  %v512 = vld [vmem:[#allocation2 + $0x188] sm:$0xff]
  %v513 = vld [vmem:[#allocation2 + $0x190] sm:$0xff]
  %v514 = vld [vmem:[#allocation2 + $0x198] sm:$0xff]
  %v515 = vld [vmem:[#allocation2 + $0x1a0] sm:$0xff]
  %v516 = vld [vmem:[#allocation2 + $0x1a8] sm:$0xff]
  %v517 = vld [vmem:[%s2] sm:$0xff]
  %v518 = vld [vmem:[%s2 + $0x8] sm:$0xff]
  %v521 = vunpack.c.l.b16 %v517
  %v522 = vunpack.c.h.b16 %v517
  %v523 = vunpack.c.l.b16 %v518
  %v524 = vunpack.c.h.b16 %v518
  %v525 = vpack.c.b16 %v523, %v521
  %v526 = vpack.c.b16 %v524, %v522
  %v582 = vunpack.c.l.b16 %v463
  %v583 = vunpack.c.h.b16 %v463
  %v584 = vunpack.c.l.b16 %v464
  %v585 = vunpack.c.h.b16 %v464
  %v586 = vunpack.c.l.b16 %v465
  %v587 = vunpack.c.h.b16 %v465
  %v588 = vunpack.c.l.b16 %v466
  %v589 = vunpack.c.h.b16 %v466
  %v590 = vunpack.c.l.b16 %v467
  %v591 = vunpack.c.h.b16 %v467
  %v592 = vunpack.c.l.b16 %v468
  %v593 = vunpack.c.h.b16 %v468
  %v594 = vunpack.c.l.b16 %v469
  %v595 = vunpack.c.h.b16 %v469
  %v596 = vunpack.c.l.b16 %v470
  %v597 = vunpack.c.h.b16 %v470
  %v598 = vunpack.c.l.b16 %v471
  %v599 = vunpack.c.h.b16 %v471
  %v600 = vunpack.c.l.b16 %v472
  %v601 = vunpack.c.h.b16 %v472
  %v602 = vunpack.c.l.b16 %v473
  %v603 = vunpack.c.h.b16 %v473
  %v604 = vunpack.c.l.b16 %v474
  %v605 = vunpack.c.h.b16 %v474
  %v606 = vunpack.c.l.b16 %v475
  %v607 = vunpack.c.h.b16 %v475
  %v608 = vunpack.c.l.b16 %v476
  %v609 = vunpack.c.h.b16 %v476
  %v610 = vunpack.c.l.b16 %v477
  %v611 = vunpack.c.h.b16 %v477
  %v612 = vunpack.c.l.b16 %v478
  %v613 = vunpack.c.h.b16 %v478
  %v614 = vunpack.c.l.b16 %v479
  %v615 = vunpack.c.h.b16 %v479
  %v616 = vunpack.c.l.b16 %v480
  %v617 = vunpack.c.h.b16 %v480
  %v618 = vunpack.c.l.b16 %v481
  %v619 = vunpack.c.h.b16 %v481
  %v620 = vunpack.c.l.b16 %v482
  %v621 = vunpack.c.h.b16 %v482
  %v622 = vunpack.c.l.b16 %v483
  %v623 = vunpack.c.h.b16 %v483
  %v624 = vunpack.c.l.b16 %v484
  %v625 = vunpack.c.h.b16 %v484
  %v626 = vunpack.c.l.b16 %v485
  %v627 = vunpack.c.h.b16 %v485
  %v628 = vunpack.c.l.b16 %v486
  %v629 = vunpack.c.h.b16 %v486
  %v630 = vunpack.c.l.b16 %v487
  %v631 = vunpack.c.h.b16 %v487
  %v632 = vunpack.c.l.b16 %v488
  %v633 = vunpack.c.h.b16 %v488
  %v634 = vunpack.c.l.b16 %v489
  %v635 = vunpack.c.h.b16 %v489
  %v636 = vunpack.c.l.b16 %v490
  %v637 = vunpack.c.h.b16 %v490
  %v638 = vunpack.c.l.b16 %v491
  %v639 = vunpack.c.h.b16 %v491
  %v640 = vunpack.c.l.b16 %v492
  %v641 = vunpack.c.h.b16 %v492
  %v642 = vunpack.c.l.b16 %v493
  %v643 = vunpack.c.h.b16 %v493
  %v644 = vunpack.c.l.b16 %v494
  %v645 = vunpack.c.h.b16 %v494
  %v646 = vunpack.c.l.b16 %v495
  %v647 = vunpack.c.h.b16 %v495
  %v648 = vunpack.c.l.b16 %v496
  %v649 = vunpack.c.h.b16 %v496
  %v650 = vunpack.c.l.b16 %v497
  %v651 = vunpack.c.h.b16 %v497
  %v652 = vunpack.c.l.b16 %v498
  %v653 = vunpack.c.h.b16 %v498
  %v654 = vunpack.c.l.b16 %v499
  %v655 = vunpack.c.h.b16 %v499
  %v656 = vunpack.c.l.b16 %v500
  %v657 = vunpack.c.h.b16 %v500
  %v658 = vunpack.c.l.b16 %v501
  %v659 = vunpack.c.h.b16 %v501
  %v660 = vunpack.c.l.b16 %v502
  %v661 = vunpack.c.h.b16 %v502
  %v662 = vunpack.c.l.b16 %v503
  %v663 = vunpack.c.h.b16 %v503
  %v664 = vunpack.c.l.b16 %v504
  %v665 = vunpack.c.h.b16 %v504
  %v666 = vunpack.c.l.b16 %v505
  %v667 = vunpack.c.h.b16 %v505
  %v668 = vunpack.c.l.b16 %v506
  %v669 = vunpack.c.h.b16 %v506
  %v670 = vunpack.c.l.b16 %v507
  %v671 = vunpack.c.h.b16 %v507
  %v672 = vunpack.c.l.b16 %v508
  %v673 = vunpack.c.h.b16 %v508
  %v674 = vunpack.c.l.b16 %v509
  %v675 = vunpack.c.h.b16 %v509
  %v676 = vunpack.c.l.b16 %v510
  %v677 = vunpack.c.h.b16 %v510
  %v678 = vunpack.c.l.b16 %v511
  %v679 = vunpack.c.h.b16 %v511
  %v680 = vunpack.c.l.b16 %v512
  %v681 = vunpack.c.h.b16 %v512
  %v682 = vunpack.c.l.b16 %v513
  %v683 = vunpack.c.h.b16 %v513
  %v684 = vunpack.c.l.b16 %v514
  %v685 = vunpack.c.h.b16 %v514
  %v686 = vunpack.c.l.b16 %v515
  %v687 = vunpack.c.h.b16 %v515
  %v688 = vunpack.c.l.b16 %v516
  %v689 = vunpack.c.h.b16 %v516
  %v690 = vpack.c.b16 %v588, %v582
  %v691 = vpack.c.b16 %v589, %v583
  %v692 = vpack.c.b16 %v590, %v584
  %v693 = vpack.c.b16 %v591, %v585
  %v694 = vpack.c.b16 %v592, %v586
  %v695 = vpack.c.b16 %v593, %v587
  %v696 = vpack.c.b16 %v600, %v594
  %v697 = vpack.c.b16 %v601, %v595
  %v698 = vpack.c.b16 %v602, %v596
  %v699 = vpack.c.b16 %v603, %v597
  %v700 = vpack.c.b16 %v604, %v598
  %v701 = vpack.c.b16 %v605, %v599
  %v702 = vpack.c.b16 %v612, %v606
  %v703 = vpack.c.b16 %v613, %v607
  %v704 = vpack.c.b16 %v614, %v608
  %v705 = vpack.c.b16 %v615, %v609
  %v706 = vpack.c.b16 %v616, %v610
  %v707 = vpack.c.b16 %v617, %v611
  %v708 = vpack.c.b16 %v624, %v618
  %v709 = vpack.c.b16 %v625, %v619
  %v710 = vpack.c.b16 %v626, %v620
  %v711 = vpack.c.b16 %v627, %v621
  %v712 = vpack.c.b16 %v628, %v622
  %v713 = vpack.c.b16 %v629, %v623
  %v714 = vpack.c.b16 %v636, %v630
  %v715 = vpack.c.b16 %v637, %v631
  %v716 = vpack.c.b16 %v638, %v632
  %v717 = vpack.c.b16 %v639, %v633
  %v718 = vpack.c.b16 %v640, %v634
  %v719 = vpack.c.b16 %v641, %v635
  %v720 = vpack.c.b16 %v648, %v642
  %v721 = vpack.c.b16 %v649, %v643
  %v722 = vpack.c.b16 %v650, %v644
  %v723 = vpack.c.b16 %v651, %v645
  %v724 = vpack.c.b16 %v652, %v646
  %v725 = vpack.c.b16 %v653, %v647
  %v726 = vpack.c.b16 %v660, %v654
  %v727 = vpack.c.b16 %v661, %v655
  %v728 = vpack.c.b16 %v662, %v656
  %v729 = vpack.c.b16 %v663, %v657
  %v730 = vpack.c.b16 %v664, %v658
  %v731 = vpack.c.b16 %v665, %v659
  %v732 = vpack.c.b16 %v672, %v666
  %v733 = vpack.c.b16 %v673, %v667
  %v734 = vpack.c.b16 %v674, %v668
  %v735 = vpack.c.b16 %v675, %v669
  %v736 = vpack.c.b16 %v676, %v670
  %v737 = vpack.c.b16 %v677, %v671
  %v738 = vpack.c.b16 %v684, %v678
  %v739 = vpack.c.b16 %v685, %v679
  %v740 = vpack.c.b16 %v686, %v680
  %v741 = vpack.c.b16 %v687, %v681
  %v742 = vpack.c.b16 %v688, %v682
  %v743 = vpack.c.b16 %v689, %v683
  %vm798 = vcmask 130048
  %v800 = vsel %vm798, %v526, 0
  %802 = vmatprep.subr.bf16.mxu0 %v733
  %803 = vmatpush1.bf16.msra.mxu0 %v732
  %804 = vmatprep.subr.bf16.mxu0 %v727
  %805 = vmatpush1.bf16.msra.mxu0 %v726
  %806 = vmatprep.subr.bf16.mxu0 %v721
  %807 = vmatpush1.bf16.msra.mxu0 %v720
  %808 = vmatprep.subr.bf16.mxu0 %v715
  %809 = vmatpush1.bf16.msra.mxu0 %v714
  %810 = vmatprep.subr.bf16.mxu0 %v709
  %811 = vmatpush1.bf16.msra.mxu0 %v708
  %812 = vmatprep.subr.bf16.mxu0 %v703
  %813 = vmatpush1.bf16.msra.mxu0 %v702
  %814 = vmatprep.subr.bf16.mxu0 %v697
  %815 = vmatpush1.bf16.msra.mxu0 %v696
  %816 = vmatprep.subr.bf16.mxu0 %v691
  %817 = vmatpush1.bf16.msra.mxu0 %v690
  %818 = vmatprep.subr.bf16.mxu0 0
  %819 = vmatpush2.bf16.msra.mxu0 0
  %820 = vmatprep.subr.bf16.mxu0 0
  %821 = vmatpush2.bf16.msra.mxu0 0
  %822 = vmatprep.subr.bf16.mxu0 0
  %823 = vmatpush2.bf16.msra.mxu0 0
  %824 = vmatprep.subr.bf16.mxu0 0
  %825 = vmatpush2.bf16.msra.mxu0 0
  %826 = vmatprep.subr.bf16.mxu0 0
  %827 = vmatpush2.bf16.msra.mxu0 0
  %828 = vmatprep.subr.bf16.mxu0 0
  %829 = vmatpush2.bf16.msra.mxu0 0
  %830 = vmatprep.subr.bf16.mxu0 0
  %831 = vmatpush2.bf16.msra.mxu0 0
  %832 = vmatprep.subr.bf16.mxu0 %v739
  %833 = vmatpush2.bf16.msra.mxu0 %v738
  %834 = vmatprep.mubr.bf16.mxu0 %v800
  %835 = vmatmul.mubr.bf16.gmra.mxu0 %v525
  %v836 = vpop.f32.mrf.mxu0
  %v837 = vadd.f32 0.0, %v836
  %v838 = vpop.f32.mrf.mxu0
  %v839 = vadd.f32 0.0, %v838
  %v840 = vpop.f32.mrf.mxu0
  %v841 = vadd.f32 0.0, %v840
  %v842 = vpop.f32.mrf.mxu0
  %v843 = vadd.f32 0.0, %v842
  %844 = vdwg.mxu0
  %845 = vmatprep.subr.bf16.mxu0 %v735
  %846 = vmatpush1.bf16.msra.mxu0 %v734
  %847 = vmatprep.subr.bf16.mxu0 %v729
  %848 = vmatpush1.bf16.msra.mxu0 %v728
  %849 = vmatprep.subr.bf16.mxu0 %v723
  %850 = vmatpush1.bf16.msra.mxu0 %v722
  %851 = vmatprep.subr.bf16.mxu0 %v717
  %852 = vmatpush1.bf16.msra.mxu0 %v716
  %853 = vmatprep.subr.bf16.mxu0 %v711
  %854 = vmatpush1.bf16.msra.mxu0 %v710
  %855 = vmatprep.subr.bf16.mxu0 %v705
  %856 = vmatpush1.bf16.msra.mxu0 %v704
  %857 = vmatprep.subr.bf16.mxu0 %v699
  %858 = vmatpush1.bf16.msra.mxu0 %v698
  %859 = vmatprep.subr.bf16.mxu0 %v693
  %860 = vmatpush1.bf16.msra.mxu0 %v692
  %861 = vmatprep.subr.bf16.mxu0 0
  %862 = vmatpush2.bf16.msra.mxu0 0
  %863 = vmatprep.subr.bf16.mxu0 0
  %864 = vmatpush2.bf16.msra.mxu0 0
  %865 = vmatprep.subr.bf16.mxu0 0
  %866 = vmatpush2.bf16.msra.mxu0 0
  %867 = vmatprep.subr.bf16.mxu0 0
  %868 = vmatpush2.bf16.msra.mxu0 0
  %869 = vmatprep.subr.bf16.mxu0 0
  %870 = vmatpush2.bf16.msra.mxu0 0
  %871 = vmatprep.subr.bf16.mxu0 0
  %872 = vmatpush2.bf16.msra.mxu0 0
  %873 = vmatprep.subr.bf16.mxu0 0
  %874 = vmatpush2.bf16.msra.mxu0 0
  %875 = vmatprep.subr.bf16.mxu0 %v741
  %876 = vmatpush2.bf16.msra.mxu0 %v740
  %877 = vmatprep.mubr.bf16.mxu0 %v800
  %878 = vmatmul.mubr.bf16.gmra.mxu0 %v525
  %v879 = vpop.f32.mrf.mxu0
  %v880 = vadd.f32 0.0, %v879
  %v881 = vpop.f32.mrf.mxu0
  %v882 = vadd.f32 0.0, %v881
  %v883 = vpop.f32.mrf.mxu0
  %v884 = vadd.f32 0.0, %v883
  %v885 = vpop.f32.mrf.mxu0
  %v886 = vadd.f32 0.0, %v885
  %887 = vdwg.mxu0
  %888 = vmatprep.subr.bf16.mxu0 %v737
  %889 = vmatpush1.bf16.msra.mxu0 %v736
  %890 = vmatprep.subr.bf16.mxu0 %v731
  %891 = vmatpush1.bf16.msra.mxu0 %v730
  %892 = vmatprep.subr.bf16.mxu0 %v725
  %893 = vmatpush1.bf16.msra.mxu0 %v724
  %894 = vmatprep.subr.bf16.mxu0 %v719
  %895 = vmatpush1.bf16.msra.mxu0 %v718
  %896 = vmatprep.subr.bf16.mxu0 %v713
  %897 = vmatpush1.bf16.msra.mxu0 %v712
  %898 = vmatprep.subr.bf16.mxu0 %v707
  %899 = vmatpush1.bf16.msra.mxu0 %v706
  %900 = vmatprep.subr.bf16.mxu0 %v701
  %901 = vmatpush1.bf16.msra.mxu0 %v700
  %902 = vmatprep.subr.bf16.mxu0 %v695
  %903 = vmatpush1.bf16.msra.mxu0 %v694
  %904 = vmatprep.subr.bf16.mxu0 0
  %905 = vmatpush2.bf16.msra.mxu0 0
  %906 = vmatprep.subr.bf16.mxu0 0
  %907 = vmatpush2.bf16.msra.mxu0 0
  %908 = vmatprep.subr.bf16.mxu0 0
  %909 = vmatpush2.bf16.msra.mxu0 0
  %910 = vmatprep.subr.bf16.mxu0 0
  %911 = vmatpush2.bf16.msra.mxu0 0
  %912 = vmatprep.subr.bf16.mxu0 0
  %913 = vmatpush2.bf16.msra.mxu0 0
  %914 = vmatprep.subr.bf16.mxu0 0
  %915 = vmatpush2.bf16.msra.mxu0 0
  %916 = vmatprep.subr.bf16.mxu0 0
  %917 = vmatpush2.bf16.msra.mxu0 0
  %918 = vmatprep.subr.bf16.mxu0 %v743
  %919 = vmatpush2.bf16.msra.mxu0 %v742
  %920 = vmatprep.mubr.bf16.mxu0 %v800
  %921 = vmatmul.mubr.bf16.gmra.mxu0 %v525
  %v922 = vpop.f32.mrf.mxu0
  %v923 = vadd.f32 0.0, %v922
  %v924 = vpop.f32.mrf.mxu0
  %v925 = vadd.f32 0.0, %v924
  %v926 = vpop.f32.mrf.mxu0
  %v927 = vadd.f32 0.0, %v926
  %v928 = vpop.f32.mrf.mxu0
  %v929 = vadd.f32 0.0, %v928
  %930 = vdwg.mxu0
  %vm931 = vcmp.ge.f32.partialorder %v837, 0.0
  %vm932 = vcmp.ge.f32.partialorder %v839, 0.0
  %vm933 = vcmp.ge.f32.partialorder %v880, 0.0
  %vm934 = vcmp.ge.f32.partialorder %v882, 0.0
  %vm935 = vcmp.ge.f32.partialorder %v923, 0.0
  %vm936 = vcmp.ge.f32.partialorder %v925, 0.0
  %vm937 = vcmp.ge.f32.partialorder %v841, 0.0
  %vm938 = vcmp.ge.f32.partialorder %v843, 0.0
  %vm939 = vcmp.ge.f32.partialorder %v884, 0.0
  %vm940 = vcmp.ge.f32.partialorder %v886, 0.0
  %vm941 = vcmp.ge.f32.partialorder %v927, 0.0
  %vm942 = vcmp.ge.f32.partialorder %v929, 0.0
  %v943 = vmul.f32 %v837, 0.01
  %v944 = vmul.f32 %v839, 0.01
  %v945 = vmul.f32 %v880, 0.01
  %v946 = vmul.f32 %v882, 0.01
  %v947 = vmul.f32 %v923, 0.01
  %v948 = vmul.f32 %v925, 0.01
  %v949 = vmul.f32 %v841, 0.01
  %v950 = vmul.f32 %v843, 0.01
  %v951 = vmul.f32 %v884, 0.01
  %v952 = vmul.f32 %v886, 0.01
  %v953 = vmul.f32 %v927, 0.01
  %v954 = vmul.f32 %v929, 0.01
  %v955 = vsel %vm931, %v837, %v943
  %v956 = vsel %vm932, %v839, %v944
  %v957 = vsel %vm933, %v880, %v945
  %v958 = vsel %vm934, %v882, %v946
  %v959 = vsel %vm935, %v923, %v947
  %v960 = vsel %vm936, %v925, %v948
  %v961 = vsel %vm937, %v841, %v949
  %v962 = vsel %vm938, %v843, %v950
  %v963 = vsel %vm939, %v884, %v951
  %v964 = vsel %vm940, %v886, %v952
  %v965 = vsel %vm941, %v927, %v953
  %v966 = vsel %vm942, %v929, %v954
  %v967 = vsel %vm22, 1, 0
  %v968 = vlaneseq
  %v969 = vshrl.u32 %v968, 7
  %v970 = vsub.s32 0, %v969
  %v971 = vrot.slane %v967, %v970
  %v972 = vlaneseq
  %v973 = vshrl.u32 %v972, 7
  %v974 = vsub.s32 1, %v973
  %v975 = vrot.slane %v967, %v974
  %v976 = vlaneseq
  %v977 = vshrl.u32 %v976, 7
  %v978 = vsub.s32 2, %v977
  %v979 = vrot.slane %v967, %v978
  %v980 = vlaneseq
  %v981 = vshrl.u32 %v980, 7
  %v982 = vsub.s32 3, %v981
  %v983 = vrot.slane %v967, %v982
  %v984 = vlaneseq
  %v985 = vshrl.u32 %v984, 7
  %v986 = vsub.s32 4, %v985
  %v987 = vrot.slane %v967, %v986
  %v988 = vlaneseq
  %v989 = vshrl.u32 %v988, 7
  %v990 = vsub.s32 5, %v989
  %v991 = vrot.slane %v967, %v990
  %vm992 = vcmp.eq.s32.totalorder %v971, 1
  %vm993 = vcmp.eq.s32.totalorder %v975, 1
  %vm994 = vcmp.eq.s32.totalorder %v979, 1
  %vm995 = vcmp.eq.s32.totalorder %v983, 1
  %vm996 = vcmp.eq.s32.totalorder %v987, 1
  %vm997 = vcmp.eq.s32.totalorder %v991, 1
  %v998 = vsel %vm992, %v955, 0.0
  %v999 = vsel %vm993, %v956, 0.0
  %v1000 = vsel %vm994, %v957, 0.0
  %v1001 = vsel %vm995, %v958, 0.0
  %v1002 = vsel %vm996, %v959, 0.0
  %v1003 = vsel %vm997, %v960, 0.0
  %v1004 = vsel %vm992, %v961, 0.0
  %v1005 = vsel %vm993, %v962, 0.0
  %v1006 = vsel %vm994, %v963, 0.0
  %v1007 = vsel %vm995, %v964, 0.0
  %v1008 = vsel %vm996, %v965, 0.0
  %v1009 = vsel %vm997, %v966, 0.0
  %v1010 = vpack.c.bf16 %v1004, %v998
  %v1011 = vpack.c.bf16 %v1005, %v999
  %v1012 = vpack.c.bf16 %v1006, %v1000
  %v1013 = vpack.c.bf16 %v1007, %v1001
  %v1014 = vpack.c.bf16 %v1008, %v1002
  %v1015 = vpack.c.bf16 %v1009, %v1003
  %vm1016 = vcmask 150528
  %1017 = vst.msk [vmem:[#allocation3] sm:$0xf] %vm1016, 0
  %1018 = vst.msk [vmem:[#allocation3 + $0x18] sm:$0xf] %vm1016, 0
  %v1025 = vunpack.c.l.b16 %v1010
  %v1026 = vunpack.c.l.b16 %v1011
  %v1027 = vunpack.c.l.b16 %v1012
  %v1028 = vunpack.c.l.b16 %v1013
  %v1029 = vunpack.c.l.b16 %v1014
  %v1030 = vunpack.c.l.b16 %v1015
  %v1031 = vunpack.c.h.b16 %v1010
  %v1032 = vunpack.c.h.b16 %v1011
  %v1033 = vunpack.c.h.b16 %v1012
  %v1034 = vunpack.c.h.b16 %v1013
  %v1035 = vunpack.c.h.b16 %v1014
  %v1036 = vunpack.c.h.b16 %v1015
  %v1037 = vpack.c.b16 %v1026, %v1025
  %v1038 = vpack.c.b16 %v1028, %v1027
  %v1039 = vpack.c.b16 %v1030, %v1029
  %v1040 = vpack.c.b16 %v1032, %v1031
  %v1041 = vpack.c.b16 %v1034, %v1033
  %v1042 = vpack.c.b16 %v1036, %v1035
  %1043 = vrot.lane.b32.xlu0 %v1037, 19
  %v1044 = vpop.permute.xlu0 %1043
  %1045 = vrot.lane.b32.xlu0 %v1038, 19
  %v1046 = vpop.permute.xlu0 %1045
  %1047 = vrot.lane.b32.xlu0 %v1039, 19
  %v1048 = vpop.permute.xlu0 %1047
  %1049 = vrot.lane.b32.xlu0 %v1040, 19
  %v1050 = vpop.permute.xlu0 %1049
  %1051 = vrot.lane.b32.xlu0 %v1041, 19
  %v1052 = vpop.permute.xlu0 %1051
  %1053 = vrot.lane.b32.xlu0 %v1042, 19
  %v1054 = vpop.permute.xlu0 %1053
  %v1055 = vrot.slane %v1044, 4
  %v1056 = vrot.slane %v1046, 4
  %v1057 = vrot.slane %v1048, 4
  %v1058 = vrot.slane %v1050, 4
  %v1059 = vrot.slane %v1052, 4
  %v1060 = vrot.slane %v1054, 4
  %vm1061 = vcmask 154624
  %v1062 = vsel %vm1061, %v1055, %v1044
  %v1063 = vsel %vm68, %v1055, %v1056
  %v1064 = vsel %vm1061, %v1063, %v1046
  %v1065 = vsel %vm68, %v1056, %v1057
  %v1066 = vsel %vm1061, %v1065, %v1048
  %v1067 = vsel %vm1061, %v1058, %v1050
  %v1068 = vsel %vm68, %v1058, %v1059
  %v1069 = vsel %vm1061, %v1068, %v1052
  %v1070 = vsel %vm68, %v1059, %v1060
  %v1071 = vsel %vm1061, %v1070, %v1054
  %vm1078 = vcmask 1043608
  %vm1079 = vcmask 1047556
  %vm1080 = vmor %vm1079, %vm1078
  %1081 = vst.msk [vmem:[#allocation3] sm:$0xff] %vm1080, %v1062
  %1082 = vst [vmem:[#allocation3 + $0x8] sm:$0xff] %v1064
  %vm1083 = vcmask 220164
  %vm1084 = vmor %vm1083, %vm31
  %1085 = vst.msk [vmem:[#allocation3 + $0x10] sm:$0xff] %vm1084, %v1066
  %1086 = vst.msk [vmem:[#allocation3 + $0x18] sm:$0xff] %vm1080, %v1067
  %1087 = vst [vmem:[#allocation3 + $0x20] sm:$0xff] %v1069
  %1088 = vst.msk [vmem:[#allocation3 + $0x28] sm:$0xff] %vm1084, %v1071
  %v1089 = vld [vmem:[#allocation3] sm:$0xff]
  %v1090 = vld [vmem:[#allocation3 + $0x8] sm:$0xff]
  %v1091 = vld [vmem:[#allocation3 + $0x10] sm:$0xff]
  %v1092 = vld [vmem:[#allocation3 + $0x18] sm:$0xff]
  %v1093 = vld [vmem:[#allocation3 + $0x20] sm:$0xff]
  %v1094 = vld [vmem:[#allocation3 + $0x28] sm:$0xff]
  %1095 = vst [vmem:[#allocation2] sm:$0xff] %v1089
  %1096 = vst [vmem:[#allocation2 + $0x8] sm:$0xff] %v1090
  %1097 = vst.msk [vmem:[#allocation2 + $0x10] sm:$0xff] %vm33, %v1091
  %1098 = vst [vmem:[#allocation2 + $0x18] sm:$0xff] %v1092
  %1099 = vst [vmem:[#allocation2 + $0x20] sm:$0xff] %v1093
  %1100 = vst.msk [vmem:[#allocation2 + $0x28] sm:$0xff] %vm33, %v1094
  %v1101 = vld [vmem:[#allocation3] sm:$0xff]
  %v1102 = vld [vmem:[#allocation3 + $0x8] sm:$0xff]
  %v1103 = vld [vmem:[#allocation3 + $0x10] sm:$0xff]
  %v1104 = vld [vmem:[#allocation3 + $0x18] sm:$0xff]
  %v1105 = vld [vmem:[#allocation3 + $0x20] sm:$0xff]
  %v1106 = vld [vmem:[#allocation3 + $0x28] sm:$0xff]
  %1113 = vrot.lane.b32.xlu0 %v1101, 127
  %v1114 = vpop.permute.xlu0 %1113
  %1115 = vrot.lane.b32.xlu0 %v1102, 127
  %v1116 = vpop.permute.xlu0 %1115
  %1117 = vrot.lane.b32.xlu0 %v1103, 127
  %v1118 = vpop.permute.xlu0 %1117
  %1119 = vrot.lane.b32.xlu0 %v1104, 127
  %v1120 = vpop.permute.xlu0 %1119
  %1121 = vrot.lane.b32.xlu0 %v1105, 127
  %v1122 = vpop.permute.xlu0 %1121
  %1123 = vrot.lane.b32.xlu0 %v1106, 127
  %v1124 = vpop.permute.xlu0 %1123
  %v1125 = vrot.slane %v1114, 4
  %v1126 = vrot.slane %v1116, 4
  %v1127 = vrot.slane %v1118, 4
  %v1128 = vrot.slane %v1120, 4
  %v1129 = vrot.slane %v1122, 4
  %v1130 = vrot.slane %v1124, 4
  %v1131 = vsel %vm68, %v1125, %v1126
  %v1132 = vsel %vm70, %v1114, %v1131
  %v1133 = vsel %vm68, %v1126, %v1127
  %v1134 = vsel %vm70, %v1116, %v1133
  %v1135 = vsel %vm70, %v1118, %v1127
  %v1136 = vsel %vm68, %v1128, %v1129
  %v1137 = vsel %vm70, %v1120, %v1136
  %v1138 = vsel %vm68, %v1129, %v1130
  %v1139 = vsel %vm70, %v1122, %v1138
  %v1140 = vsel %vm70, %v1124, %v1130
  %1147 = vst [vmem:[#allocation2 + $0x30] sm:$0xff] %v1132
  %1148 = vst [vmem:[#allocation2 + $0x38] sm:$0xff] %v1134
  %1149 = vst.msk [vmem:[#allocation2 + $0x40] sm:$0xff] %vm33, %v1135
  %1150 = vst [vmem:[#allocation2 + $0x48] sm:$0xff] %v1137
  %1151 = vst [vmem:[#allocation2 + $0x50] sm:$0xff] %v1139
  %1152 = vst.msk [vmem:[#allocation2 + $0x58] sm:$0xff] %vm33, %v1140
  %v1153 = vld [vmem:[#allocation3] sm:$0xff]
  %v1154 = vld [vmem:[#allocation3 + $0x8] sm:$0xff]
  %v1155 = vld [vmem:[#allocation3 + $0x10] sm:$0xff]
  %v1156 = vld [vmem:[#allocation3 + $0x18] sm:$0xff]
  %v1157 = vld [vmem:[#allocation3 + $0x20] sm:$0xff]
  %v1158 = vld [vmem:[#allocation3 + $0x28] sm:$0xff]
  %1165 = vrot.lane.b32.xlu0 %v1153, 126
  %v1166 = vpop.permute.xlu0 %1165
  %1167 = vrot.lane.b32.xlu0 %v1154, 126
  %v1168 = vpop.permute.xlu0 %1167
  %1169 = vrot.lane.b32.xlu0 %v1155, 126
  %v1170 = vpop.permute.xlu0 %1169
  %1171 = vrot.lane.b32.xlu0 %v1156, 126
  %v1172 = vpop.permute.xlu0 %1171
  %1173 = vrot.lane.b32.xlu0 %v1157, 126
  %v1174 = vpop.permute.xlu0 %1173
  %1175 = vrot.lane.b32.xlu0 %v1158, 126
  %v1176 = vpop.permute.xlu0 %1175
  %v1177 = vrot.slane %v1166, 4
  %v1178 = vrot.slane %v1168, 4
  %v1179 = vrot.slane %v1170, 4
  %v1180 = vrot.slane %v1172, 4
  %v1181 = vrot.slane %v1174, 4
  %v1182 = vrot.slane %v1176, 4
  %v1183 = vsel %vm68, %v1177, %v1178
  %v1184 = vsel %vm123, %v1166, %v1183
  %v1185 = vsel %vm68, %v1178, %v1179
  %v1186 = vsel %vm123, %v1168, %v1185
  %v1187 = vsel %vm123, %v1170, %v1179
  %v1188 = vsel %vm68, %v1180, %v1181
  %v1189 = vsel %vm123, %v1172, %v1188
  %v1190 = vsel %vm68, %v1181, %v1182
  %v1191 = vsel %vm123, %v1174, %v1190
  %v1192 = vsel %vm123, %v1176, %v1182
  %1199 = vst [vmem:[#allocation2 + $0x60] sm:$0xff] %v1184
  %1200 = vst [vmem:[#allocation2 + $0x68] sm:$0xff] %v1186
  %1201 = vst.msk [vmem:[#allocation2 + $0x70] sm:$0xff] %vm33, %v1187
  %1202 = vst [vmem:[#allocation2 + $0x78] sm:$0xff] %v1189
  %1203 = vst [vmem:[#allocation2 + $0x80] sm:$0xff] %v1191
  %1204 = vst.msk [vmem:[#allocation2 + $0x88] sm:$0xff] %vm33, %v1192
  %v1205 = vld [vmem:[#allocation3] sm:$0xff]
  %v1206 = vld [vmem:[#allocation3 + $0x8] sm:$0xff]
  %v1207 = vld [vmem:[#allocation3 + $0x10] sm:$0xff]
  %v1208 = vld [vmem:[#allocation3 + $0x18] sm:$0xff]
  %v1209 = vld [vmem:[#allocation3 + $0x20] sm:$0xff]
  %v1210 = vld [vmem:[#allocation3 + $0x28] sm:$0xff]
  %1217 = vrot.lane.b32.xlu0 %v1205, 110
  %v1218 = vpop.permute.xlu0 %1217
  %1219 = vrot.lane.b32.xlu0 %v1206, 110
  %v1220 = vpop.permute.xlu0 %1219
  %1221 = vrot.lane.b32.xlu0 %v1207, 110
  %v1222 = vpop.permute.xlu0 %1221
  %1223 = vrot.lane.b32.xlu0 %v1208, 110
  %v1224 = vpop.permute.xlu0 %1223
  %1225 = vrot.lane.b32.xlu0 %v1209, 110
  %v1226 = vpop.permute.xlu0 %1225
  %1227 = vrot.lane.b32.xlu0 %v1210, 110
  %v1228 = vpop.permute.xlu0 %1227
  %v1229 = vrot.slane %v1218, 4
  %v1230 = vrot.slane %v1220, 4
  %v1231 = vrot.slane %v1222, 4
  %v1232 = vrot.slane %v1224, 4
  %v1233 = vrot.slane %v1226, 4
  %v1234 = vrot.slane %v1228, 4
  %v1235 = vsel %vm68, %v1229, %v1230
  %v1236 = vsel %vm176, %v1218, %v1235
  %v1237 = vsel %vm68, %v1230, %v1231
  %v1238 = vsel %vm176, %v1220, %v1237
  %v1239 = vsel %vm176, %v1222, %v1231
  %v1240 = vsel %vm68, %v1232, %v1233
  %v1241 = vsel %vm176, %v1224, %v1240
  %v1242 = vsel %vm68, %v1233, %v1234
  %v1243 = vsel %vm176, %v1226, %v1242
  %v1244 = vsel %vm176, %v1228, %v1234
  %1251 = vst [vmem:[#allocation2 + $0x90] sm:$0xff] %v1236
  %1252 = vst [vmem:[#allocation2 + $0x98] sm:$0xff] %v1238
  %1253 = vst.msk [vmem:[#allocation2 + $0xa0] sm:$0xff] %vm33, %v1239
  %1254 = vst [vmem:[#allocation2 + $0xa8] sm:$0xff] %v1241
  %1255 = vst [vmem:[#allocation2 + $0xb0] sm:$0xff] %v1243
  %1256 = vst.msk [vmem:[#allocation2 + $0xb8] sm:$0xff] %vm33, %v1244
  %v1257 = vld [vmem:[#allocation3] sm:$0xff]
  %v1258 = vld [vmem:[#allocation3 + $0x8] sm:$0xff]
  %v1259 = vld [vmem:[#allocation3 + $0x10] sm:$0xff]
  %v1260 = vld [vmem:[#allocation3 + $0x18] sm:$0xff]
  %v1261 = vld [vmem:[#allocation3 + $0x20] sm:$0xff]
  %v1262 = vld [vmem:[#allocation3 + $0x28] sm:$0xff]
  %1269 = vrot.lane.b32.xlu0 %v1257, 109
  %v1270 = vpop.permute.xlu0 %1269
  %1271 = vrot.lane.b32.xlu0 %v1258, 109
  %v1272 = vpop.permute.xlu0 %1271
  %1273 = vrot.lane.b32.xlu0 %v1259, 109
  %v1274 = vpop.permute.xlu0 %1273
  %1275 = vrot.lane.b32.xlu0 %v1260, 109
  %v1276 = vpop.permute.xlu0 %1275
  %1277 = vrot.lane.b32.xlu0 %v1261, 109
  %v1278 = vpop.permute.xlu0 %1277
  %1279 = vrot.lane.b32.xlu0 %v1262, 109
  %v1280 = vpop.permute.xlu0 %1279
  %v1281 = vrot.slane %v1270, 4
  %v1282 = vrot.slane %v1272, 4
  %v1283 = vrot.slane %v1274, 4
  %v1284 = vrot.slane %v1276, 4
  %v1285 = vrot.slane %v1278, 4
  %v1286 = vrot.slane %v1280, 4
  %v1287 = vsel %vm68, %v1281, %v1282
  %v1288 = vsel %vm229, %v1270, %v1287
  %v1289 = vsel %vm68, %v1282, %v1283
  %v1290 = vsel %vm229, %v1272, %v1289
  %v1291 = vsel %vm229, %v1274, %v1283
  %v1292 = vsel %vm68, %v1284, %v1285
  %v1293 = vsel %vm229, %v1276, %v1292
  %v1294 = vsel %vm68, %v1285, %v1286
  %v1295 = vsel %vm229, %v1278, %v1294
  %v1296 = vsel %vm229, %v1280, %v1286
  %1303 = vst [vmem:[#allocation2 + $0xc0] sm:$0xff] %v1288
  %1304 = vst [vmem:[#allocation2 + $0xc8] sm:$0xff] %v1290
  %1305 = vst.msk [vmem:[#allocation2 + $0xd0] sm:$0xff] %vm33, %v1291
  %1306 = vst [vmem:[#allocation2 + $0xd8] sm:$0xff] %v1293
  %1307 = vst [vmem:[#allocation2 + $0xe0] sm:$0xff] %v1295
  %1308 = vst.msk [vmem:[#allocation2 + $0xe8] sm:$0xff] %vm33, %v1296
  %v1309 = vld [vmem:[#allocation3] sm:$0xff]
  %v1310 = vld [vmem:[#allocation3 + $0x8] sm:$0xff]
  %v1311 = vld [vmem:[#allocation3 + $0x10] sm:$0xff]
  %v1312 = vld [vmem:[#allocation3 + $0x18] sm:$0xff]
  %v1313 = vld [vmem:[#allocation3 + $0x20] sm:$0xff]
  %v1314 = vld [vmem:[#allocation3 + $0x28] sm:$0xff]
  %1321 = vrot.lane.b32.xlu0 %v1309, 108
  %v1322 = vpop.permute.xlu0 %1321
  %1323 = vrot.lane.b32.xlu0 %v1310, 108
  %v1324 = vpop.permute.xlu0 %1323
  %1325 = vrot.lane.b32.xlu0 %v1311, 108
  %v1326 = vpop.permute.xlu0 %1325
  %1327 = vrot.lane.b32.xlu0 %v1312, 108
  %v1328 = vpop.permute.xlu0 %1327
  %1329 = vrot.lane.b32.xlu0 %v1313, 108
  %v1330 = vpop.permute.xlu0 %1329
  %1331 = vrot.lane.b32.xlu0 %v1314, 108
  %v1332 = vpop.permute.xlu0 %1331
  %v1333 = vrot.slane %v1322, 4
  %v1334 = vrot.slane %v1324, 4
  %v1335 = vrot.slane %v1326, 4
  %v1336 = vrot.slane %v1328, 4
  %v1337 = vrot.slane %v1330, 4
  %v1338 = vrot.slane %v1332, 4
  %v1339 = vsel %vm68, %v1333, %v1334
  %v1340 = vsel %vm282, %v1322, %v1339
  %v1341 = vsel %vm68, %v1334, %v1335
  %v1342 = vsel %vm282, %v1324, %v1341
  %v1343 = vsel %vm282, %v1326, %v1335
  %v1344 = vsel %vm68, %v1336, %v1337
  %v1345 = vsel %vm282, %v1328, %v1344
  %v1346 = vsel %vm68, %v1337, %v1338
  %v1347 = vsel %vm282, %v1330, %v1346
  %v1348 = vsel %vm282, %v1332, %v1338
  %1355 = vst [vmem:[#allocation2 + $0xf0] sm:$0xff] %v1340
  %1356 = vst [vmem:[#allocation2 + $0xf8] sm:$0xff] %v1342
  %1357 = vst.msk [vmem:[#allocation2 + $0x100] sm:$0xff] %vm33, %v1343
  %1358 = vst [vmem:[#allocation2 + $0x108] sm:$0xff] %v1345
  %1359 = vst [vmem:[#allocation2 + $0x110] sm:$0xff] %v1347
  %1360 = vst.msk [vmem:[#allocation2 + $0x118] sm:$0xff] %vm33, %v1348
  %v1361 = vld [vmem:[#allocation3] sm:$0xff]
  %v1362 = vld [vmem:[#allocation3 + $0x8] sm:$0xff]
  %v1363 = vld [vmem:[#allocation3 + $0x10] sm:$0xff]
  %v1364 = vld [vmem:[#allocation3 + $0x18] sm:$0xff]
  %v1365 = vld [vmem:[#allocation3 + $0x20] sm:$0xff]
  %v1366 = vld [vmem:[#allocation3 + $0x28] sm:$0xff]
  %1373 = vrot.lane.b32.xlu0 %v1361, 92
  %v1374 = vpop.permute.xlu0 %1373
  %1375 = vrot.lane.b32.xlu0 %v1362, 92
  %v1376 = vpop.permute.xlu0 %1375
  %1377 = vrot.lane.b32.xlu0 %v1363, 92
  %v1378 = vpop.permute.xlu0 %1377
  %1379 = vrot.lane.b32.xlu0 %v1364, 92
  %v1380 = vpop.permute.xlu0 %1379
  %1381 = vrot.lane.b32.xlu0 %v1365, 92
  %v1382 = vpop.permute.xlu0 %1381
  %1383 = vrot.lane.b32.xlu0 %v1366, 92
  %v1384 = vpop.permute.xlu0 %1383
  %v1385 = vrot.slane %v1374, 4
  %v1386 = vrot.slane %v1376, 4
  %v1387 = vrot.slane %v1378, 4
  %v1388 = vrot.slane %v1380, 4
  %v1389 = vrot.slane %v1382, 4
  %v1390 = vrot.slane %v1384, 4
  %v1391 = vsel %vm68, %v1385, %v1386
  %v1392 = vsel %vm335, %v1374, %v1391
  %v1393 = vsel %vm68, %v1386, %v1387
  %v1394 = vsel %vm335, %v1376, %v1393
  %v1395 = vsel %vm335, %v1378, %v1387
  %v1396 = vsel %vm68, %v1388, %v1389
  %v1397 = vsel %vm335, %v1380, %v1396
  %v1398 = vsel %vm68, %v1389, %v1390
  %v1399 = vsel %vm335, %v1382, %v1398
  %v1400 = vsel %vm335, %v1384, %v1390
  %1407 = vst [vmem:[#allocation2 + $0x120] sm:$0xff] %v1392
  %1408 = vst [vmem:[#allocation2 + $0x128] sm:$0xff] %v1394
  %1409 = vst.msk [vmem:[#allocation2 + $0x130] sm:$0xff] %vm33, %v1395
  %1410 = vst [vmem:[#allocation2 + $0x138] sm:$0xff] %v1397
  %1411 = vst [vmem:[#allocation2 + $0x140] sm:$0xff] %v1399
  %1412 = vst.msk [vmem:[#allocation2 + $0x148] sm:$0xff] %vm33, %v1400
  %v1413 = vld [vmem:[#allocation3] sm:$0xff]
  %v1414 = vld [vmem:[#allocation3 + $0x8] sm:$0xff]
  %v1415 = vld [vmem:[#allocation3 + $0x10] sm:$0xff]
  %v1416 = vld [vmem:[#allocation3 + $0x18] sm:$0xff]
  %v1417 = vld [vmem:[#allocation3 + $0x20] sm:$0xff]
  %v1418 = vld [vmem:[#allocation3 + $0x28] sm:$0xff]
  %1425 = vrot.lane.b32.xlu0 %v1413, 91
  %v1426 = vpop.permute.xlu0 %1425
  %1427 = vrot.lane.b32.xlu0 %v1414, 91
  %v1428 = vpop.permute.xlu0 %1427
  %1429 = vrot.lane.b32.xlu0 %v1415, 91
  %v1430 = vpop.permute.xlu0 %1429
  %1431 = vrot.lane.b32.xlu0 %v1416, 91
  %v1432 = vpop.permute.xlu0 %1431
  %1433 = vrot.lane.b32.xlu0 %v1417, 91
  %v1434 = vpop.permute.xlu0 %1433
  %1435 = vrot.lane.b32.xlu0 %v1418, 91
  %v1436 = vpop.permute.xlu0 %1435
  %v1437 = vrot.slane %v1426, 4
  %v1438 = vrot.slane %v1428, 4
  %v1439 = vrot.slane %v1430, 4
  %v1440 = vrot.slane %v1432, 4
  %v1441 = vrot.slane %v1434, 4
  %v1442 = vrot.slane %v1436, 4
  %v1443 = vsel %vm68, %v1437, %v1438
  %v1444 = vsel %vm388, %v1426, %v1443
  %v1445 = vsel %vm68, %v1438, %v1439
  %v1446 = vsel %vm388, %v1428, %v1445
  %v1447 = vsel %vm388, %v1430, %v1439
  %v1448 = vsel %vm68, %v1440, %v1441
  %v1449 = vsel %vm388, %v1432, %v1448
  %v1450 = vsel %vm68, %v1441, %v1442
  %v1451 = vsel %vm388, %v1434, %v1450
  %v1452 = vsel %vm388, %v1436, %v1442
  %1459 = vst [vmem:[#allocation2 + $0x150] sm:$0xff] %v1444
  %1460 = vst [vmem:[#allocation2 + $0x158] sm:$0xff] %v1446
  %1461 = vst.msk [vmem:[#allocation2 + $0x160] sm:$0xff] %vm33, %v1447
  %1462 = vst [vmem:[#allocation2 + $0x168] sm:$0xff] %v1449
  %1463 = vst [vmem:[#allocation2 + $0x170] sm:$0xff] %v1451
  %1464 = vst.msk [vmem:[#allocation2 + $0x178] sm:$0xff] %vm33, %v1452
  %v1465 = vld [vmem:[#allocation3] sm:$0xff]
  %v1466 = vld [vmem:[#allocation3 + $0x8] sm:$0xff]
  %v1467 = vld [vmem:[#allocation3 + $0x10] sm:$0xff]
  %v1468 = vld [vmem:[#allocation3 + $0x18] sm:$0xff]
  %v1469 = vld [vmem:[#allocation3 + $0x20] sm:$0xff]
  %v1470 = vld [vmem:[#allocation3 + $0x28] sm:$0xff]
  %1477 = vrot.lane.b32.xlu0 %v1465, 90
  %v1478 = vpop.permute.xlu0 %1477
  %1479 = vrot.lane.b32.xlu0 %v1466, 90
  %v1480 = vpop.permute.xlu0 %1479
  %1481 = vrot.lane.b32.xlu0 %v1467, 90
  %v1482 = vpop.permute.xlu0 %1481
  %1483 = vrot.lane.b32.xlu0 %v1468, 90
  %v1484 = vpop.permute.xlu0 %1483
  %1485 = vrot.lane.b32.xlu0 %v1469, 90
  %v1486 = vpop.permute.xlu0 %1485
  %1487 = vrot.lane.b32.xlu0 %v1470, 90
  %v1488 = vpop.permute.xlu0 %1487
  %v1489 = vrot.slane %v1478, 4
  %v1490 = vrot.slane %v1480, 4
  %v1491 = vrot.slane %v1482, 4
  %v1492 = vrot.slane %v1484, 4
  %v1493 = vrot.slane %v1486, 4
  %v1494 = vrot.slane %v1488, 4
  %v1495 = vsel %vm68, %v1489, %v1490
  %v1496 = vsel %vm441, %v1478, %v1495
  %v1497 = vsel %vm68, %v1490, %v1491
  %v1498 = vsel %vm441, %v1480, %v1497
  %v1499 = vsel %vm441, %v1482, %v1491
  %v1500 = vsel %vm68, %v1492, %v1493
  %v1501 = vsel %vm441, %v1484, %v1500
  %v1502 = vsel %vm68, %v1493, %v1494
  %v1503 = vsel %vm441, %v1486, %v1502
  %v1504 = vsel %vm441, %v1488, %v1494
  %1511 = vst [vmem:[#allocation2 + $0x180] sm:$0xff] %v1496
  %1512 = vst [vmem:[#allocation2 + $0x188] sm:$0xff] %v1498
  %1513 = vst.msk [vmem:[#allocation2 + $0x190] sm:$0xff] %vm33, %v1499
  %1514 = vst [vmem:[#allocation2 + $0x198] sm:$0xff] %v1501
  %1515 = vst [vmem:[#allocation2 + $0x1a0] sm:$0xff] %v1503
  %1516 = vst.msk [vmem:[#allocation2 + $0x1a8] sm:$0xff] %vm33, %v1504
  %v1517 = vld [vmem:[#allocation2] sm:$0xff]
  %v1518 = vld [vmem:[#allocation2 + $0x8] sm:$0xff]
  %v1519 = vld [vmem:[#allocation2 + $0x10] sm:$0xff]
  %v1520 = vld [vmem:[#allocation2 + $0x18] sm:$0xff]
  %v1521 = vld [vmem:[#allocation2 + $0x20] sm:$0xff]
  %v1522 = vld [vmem:[#allocation2 + $0x28] sm:$0xff]
  %v1523 = vld [vmem:[#allocation2 + $0x30] sm:$0xff]
  %v1524 = vld [vmem:[#allocation2 + $0x38] sm:$0xff]
  %v1525 = vld [vmem:[#allocation2 + $0x40] sm:$0xff]
  %v1526 = vld [vmem:[#allocation2 + $0x48] sm:$0xff]
  %v1527 = vld [vmem:[#allocation2 + $0x50] sm:$0xff]
  %v1528 = vld [vmem:[#allocation2 + $0x58] sm:$0xff]
  %v1529 = vld [vmem:[#allocation2 + $0x60] sm:$0xff]
  %v1530 = vld [vmem:[#allocation2 + $0x68] sm:$0xff]
  %v1531 = vld [vmem:[#allocation2 + $0x70] sm:$0xff]
  %v1532 = vld [vmem:[#allocation2 + $0x78] sm:$0xff]
  %v1533 = vld [vmem:[#allocation2 + $0x80] sm:$0xff]
  %v1534 = vld [vmem:[#allocation2 + $0x88] sm:$0xff]
  %v1535 = vld [vmem:[#allocation2 + $0x90] sm:$0xff]
  %v1536 = vld [vmem:[#allocation2 + $0x98] sm:$0xff]
  %v1537 = vld [vmem:[#allocation2 + $0xa0] sm:$0xff]
  %v1538 = vld [vmem:[#allocation2 + $0xa8] sm:$0xff]
  %v1539 = vld [vmem:[#allocation2 + $0xb0] sm:$0xff]
  %v1540 = vld [vmem:[#allocation2 + $0xb8] sm:$0xff]
  %v1541 = vld [vmem:[#allocation2 + $0xc0] sm:$0xff]
  %v1542 = vld [vmem:[#allocation2 + $0xc8] sm:$0xff]
  %v1543 = vld [vmem:[#allocation2 + $0xd0] sm:$0xff]
  %v1544 = vld [vmem:[#allocation2 + $0xd8] sm:$0xff]
  %v1545 = vld [vmem:[#allocation2 + $0xe0] sm:$0xff]
  %v1546 = vld [vmem:[#allocation2 + $0xe8] sm:$0xff]
  %v1547 = vld [vmem:[#allocation2 + $0xf0] sm:$0xff]
  %v1548 = vld [vmem:[#allocation2 + $0xf8] sm:$0xff]
  %v1549 = vld [vmem:[#allocation2 + $0x100] sm:$0xff]
  %v1550 = vld [vmem:[#allocation2 + $0x108] sm:$0xff]
  %v1551 = vld [vmem:[#allocation2 + $0x110] sm:$0xff]
  %v1552 = vld [vmem:[#allocation2 + $0x118] sm:$0xff]
  %v1553 = vld [vmem:[#allocation2 + $0x120] sm:$0xff]
  %v1554 = vld [vmem:[#allocation2 + $0x128] sm:$0xff]
  %v1555 = vld [vmem:[#allocation2 + $0x130] sm:$0xff]
  %v1556 = vld [vmem:[#allocation2 + $0x138] sm:$0xff]
  %v1557 = vld [vmem:[#allocation2 + $0x140] sm:$0xff]
  %v1558 = vld [vmem:[#allocation2 + $0x148] sm:$0xff]
  %v1559 = vld [vmem:[#allocation2 + $0x150] sm:$0xff]
  %v1560 = vld [vmem:[#allocation2 + $0x158] sm:$0xff]
  %v1561 = vld [vmem:[#allocation2 + $0x160] sm:$0xff]
  %v1562 = vld [vmem:[#allocation2 + $0x168] sm:$0xff]
  %v1563 = vld [vmem:[#allocation2 + $0x170] sm:$0xff]
  %v1564 = vld [vmem:[#allocation2 + $0x178] sm:$0xff]
  %v1565 = vld [vmem:[#allocation2 + $0x180] sm:$0xff]
  %v1566 = vld [vmem:[#allocation2 + $0x188] sm:$0xff]
  %v1567 = vld [vmem:[#allocation2 + $0x190] sm:$0xff]
  %v1568 = vld [vmem:[#allocation2 + $0x198] sm:$0xff]
  %v1569 = vld [vmem:[#allocation2 + $0x1a0] sm:$0xff]
  %v1570 = vld [vmem:[#allocation2 + $0x1a8] sm:$0xff]
  %v1571 = vld [vmem:[%s3] sm:$0xff]
  %v1573 = vunpack.c.l.b16 %v1571
  %v1574 = vunpack.c.h.b16 %v1571
  %v1575 = vpack.c.b16 %v1573, %v1573
  %v1576 = vpack.c.b16 %v1574, %v1574
  %v1632 = vunpack.c.l.b16 %v1517
  %v1633 = vunpack.c.h.b16 %v1517
  %v1634 = vunpack.c.l.b16 %v1518
  %v1635 = vunpack.c.h.b16 %v1518
  %v1636 = vunpack.c.l.b16 %v1519
  %v1637 = vunpack.c.h.b16 %v1519
  %v1638 = vunpack.c.l.b16 %v1520
  %v1639 = vunpack.c.h.b16 %v1520
  %v1640 = vunpack.c.l.b16 %v1521
  %v1641 = vunpack.c.h.b16 %v1521
  %v1642 = vunpack.c.l.b16 %v1522
  %v1643 = vunpack.c.h.b16 %v1522
  %v1644 = vunpack.c.l.b16 %v1523
  %v1645 = vunpack.c.h.b16 %v1523
  %v1646 = vunpack.c.l.b16 %v1524
  %v1647 = vunpack.c.h.b16 %v1524
  %v1648 = vunpack.c.l.b16 %v1525
  %v1649 = vunpack.c.h.b16 %v1525
  %v1650 = vunpack.c.l.b16 %v1526
  %v1651 = vunpack.c.h.b16 %v1526
  %v1652 = vunpack.c.l.b16 %v1527
  %v1653 = vunpack.c.h.b16 %v1527
  %v1654 = vunpack.c.l.b16 %v1528
  %v1655 = vunpack.c.h.b16 %v1528
  %v1656 = vunpack.c.l.b16 %v1529
  %v1657 = vunpack.c.h.b16 %v1529
  %v1658 = vunpack.c.l.b16 %v1530
  %v1659 = vunpack.c.h.b16 %v1530
  %v1660 = vunpack.c.l.b16 %v1531
  %v1661 = vunpack.c.h.b16 %v1531
  %v1662 = vunpack.c.l.b16 %v1532
  %v1663 = vunpack.c.h.b16 %v1532
  %v1664 = vunpack.c.l.b16 %v1533
  %v1665 = vunpack.c.h.b16 %v1533
  %v1666 = vunpack.c.l.b16 %v1534
  %v1667 = vunpack.c.h.b16 %v1534
  %v1668 = vunpack.c.l.b16 %v1535
  %v1669 = vunpack.c.h.b16 %v1535
  %v1670 = vunpack.c.l.b16 %v1536
  %v1671 = vunpack.c.h.b16 %v1536
  %v1672 = vunpack.c.l.b16 %v1537
  %v1673 = vunpack.c.h.b16 %v1537
  %v1674 = vunpack.c.l.b16 %v1538
  %v1675 = vunpack.c.h.b16 %v1538
  %v1676 = vunpack.c.l.b16 %v1539
  %v1677 = vunpack.c.h.b16 %v1539
  %v1678 = vunpack.c.l.b16 %v1540
  %v1679 = vunpack.c.h.b16 %v1540
  %v1680 = vunpack.c.l.b16 %v1541
  %v1681 = vunpack.c.h.b16 %v1541
  %v1682 = vunpack.c.l.b16 %v1542
  %v1683 = vunpack.c.h.b16 %v1542
  %v1684 = vunpack.c.l.b16 %v1543
  %v1685 = vunpack.c.h.b16 %v1543
  %v1686 = vunpack.c.l.b16 %v1544
  %v1687 = vunpack.c.h.b16 %v1544
  %v1688 = vunpack.c.l.b16 %v1545
  %v1689 = vunpack.c.h.b16 %v1545
  %v1690 = vunpack.c.l.b16 %v1546
  %v1691 = vunpack.c.h.b16 %v1546
  %v1692 = vunpack.c.l.b16 %v1547
  %v1693 = vunpack.c.h.b16 %v1547
  %v1694 = vunpack.c.l.b16 %v1548
  %v1695 = vunpack.c.h.b16 %v1548
  %v1696 = vunpack.c.l.b16 %v1549
  %v1697 = vunpack.c.h.b16 %v1549
  %v1698 = vunpack.c.l.b16 %v1550
  %v1699 = vunpack.c.h.b16 %v1550
  %v1700 = vunpack.c.l.b16 %v1551
  %v1701 = vunpack.c.h.b16 %v1551
  %v1702 = vunpack.c.l.b16 %v1552
  %v1703 = vunpack.c.h.b16 %v1552
  %v1704 = vunpack.c.l.b16 %v1553
  %v1705 = vunpack.c.h.b16 %v1553
  %v1706 = vunpack.c.l.b16 %v1554
  %v1707 = vunpack.c.h.b16 %v1554
  %v1708 = vunpack.c.l.b16 %v1555
  %v1709 = vunpack.c.h.b16 %v1555
  %v1710 = vunpack.c.l.b16 %v1556
  %v1711 = vunpack.c.h.b16 %v1556
  %v1712 = vunpack.c.l.b16 %v1557
  %v1713 = vunpack.c.h.b16 %v1557
  %v1714 = vunpack.c.l.b16 %v1558
  %v1715 = vunpack.c.h.b16 %v1558
  %v1716 = vunpack.c.l.b16 %v1559
  %v1717 = vunpack.c.h.b16 %v1559
  %v1718 = vunpack.c.l.b16 %v1560
  %v1719 = vunpack.c.h.b16 %v1560
  %v1720 = vunpack.c.l.b16 %v1561
  %v1721 = vunpack.c.h.b16 %v1561
  %v1722 = vunpack.c.l.b16 %v1562
  %v1723 = vunpack.c.h.b16 %v1562
  %v1724 = vunpack.c.l.b16 %v1563
  %v1725 = vunpack.c.h.b16 %v1563
  %v1726 = vunpack.c.l.b16 %v1564
  %v1727 = vunpack.c.h.b16 %v1564
  %v1728 = vunpack.c.l.b16 %v1565
  %v1729 = vunpack.c.h.b16 %v1565
  %v1730 = vunpack.c.l.b16 %v1566
  %v1731 = vunpack.c.h.b16 %v1566
  %v1732 = vunpack.c.l.b16 %v1567
  %v1733 = vunpack.c.h.b16 %v1567
  %v1734 = vunpack.c.l.b16 %v1568
  %v1735 = vunpack.c.h.b16 %v1568
  %v1736 = vunpack.c.l.b16 %v1569
  %v1737 = vunpack.c.h.b16 %v1569
  %v1738 = vunpack.c.l.b16 %v1570
  %v1739 = vunpack.c.h.b16 %v1570
  %v1740 = vpack.c.b16 %v1638, %v1632
  %v1741 = vpack.c.b16 %v1639, %v1633
  %v1742 = vpack.c.b16 %v1640, %v1634
  %v1743 = vpack.c.b16 %v1641, %v1635
  %v1744 = vpack.c.b16 %v1642, %v1636
  %v1745 = vpack.c.b16 %v1643, %v1637
  %v1746 = vpack.c.b16 %v1650, %v1644
  %v1747 = vpack.c.b16 %v1651, %v1645
  %v1748 = vpack.c.b16 %v1652, %v1646
  %v1749 = vpack.c.b16 %v1653, %v1647
  %v1750 = vpack.c.b16 %v1654, %v1648
  %v1751 = vpack.c.b16 %v1655, %v1649
  %v1752 = vpack.c.b16 %v1662, %v1656
  %v1753 = vpack.c.b16 %v1663, %v1657
  %v1754 = vpack.c.b16 %v1664, %v1658
  %v1755 = vpack.c.b16 %v1665, %v1659
  %v1756 = vpack.c.b16 %v1666, %v1660
  %v1757 = vpack.c.b16 %v1667, %v1661
  %v1758 = vpack.c.b16 %v1674, %v1668
  %v1759 = vpack.c.b16 %v1675, %v1669
  %v1760 = vpack.c.b16 %v1676, %v1670
  %v1761 = vpack.c.b16 %v1677, %v1671
  %v1762 = vpack.c.b16 %v1678, %v1672
  %v1763 = vpack.c.b16 %v1679, %v1673
  %v1764 = vpack.c.b16 %v1686, %v1680
  %v1765 = vpack.c.b16 %v1687, %v1681
  %v1766 = vpack.c.b16 %v1688, %v1682
  %v1767 = vpack.c.b16 %v1689, %v1683
  %v1768 = vpack.c.b16 %v1690, %v1684
  %v1769 = vpack.c.b16 %v1691, %v1685
  %v1770 = vpack.c.b16 %v1698, %v1692
  %v1771 = vpack.c.b16 %v1699, %v1693
  %v1772 = vpack.c.b16 %v1700, %v1694
  %v1773 = vpack.c.b16 %v1701, %v1695
  %v1774 = vpack.c.b16 %v1702, %v1696
  %v1775 = vpack.c.b16 %v1703, %v1697
  %v1776 = vpack.c.b16 %v1710, %v1704
  %v1777 = vpack.c.b16 %v1711, %v1705
  %v1778 = vpack.c.b16 %v1712, %v1706
  %v1779 = vpack.c.b16 %v1713, %v1707
  %v1780 = vpack.c.b16 %v1714, %v1708
  %v1781 = vpack.c.b16 %v1715, %v1709
  %v1782 = vpack.c.b16 %v1722, %v1716
  %v1783 = vpack.c.b16 %v1723, %v1717
  %v1784 = vpack.c.b16 %v1724, %v1718
  %v1785 = vpack.c.b16 %v1725, %v1719
  %v1786 = vpack.c.b16 %v1726, %v1720
  %v1787 = vpack.c.b16 %v1727, %v1721
  %v1788 = vpack.c.b16 %v1734, %v1728
  %v1789 = vpack.c.b16 %v1735, %v1729
  %v1790 = vpack.c.b16 %v1736, %v1730
  %v1791 = vpack.c.b16 %v1737, %v1731
  %v1792 = vpack.c.b16 %v1738, %v1732
  %v1793 = vpack.c.b16 %v1739, %v1733
  %v1849 = vsel %vm798, %v1576, 0
  %1851 = vmatprep.subr.bf16.mxu0 %v1783
  %1852 = vmatpush1.bf16.msra.mxu0 %v1782
  %1853 = vmatprep.subr.bf16.mxu0 %v1777
  %1854 = vmatpush1.bf16.msra.mxu0 %v1776
  %1855 = vmatprep.subr.bf16.mxu0 %v1771
  %1856 = vmatpush1.bf16.msra.mxu0 %v1770
  %1857 = vmatprep.subr.bf16.mxu0 %v1765
  %1858 = vmatpush1.bf16.msra.mxu0 %v1764
  %1859 = vmatprep.subr.bf16.mxu0 %v1759
  %1860 = vmatpush1.bf16.msra.mxu0 %v1758
  %1861 = vmatprep.subr.bf16.mxu0 %v1753
  %1862 = vmatpush1.bf16.msra.mxu0 %v1752
  %1863 = vmatprep.subr.bf16.mxu0 %v1747
  %1864 = vmatpush1.bf16.msra.mxu0 %v1746
  %1865 = vmatprep.subr.bf16.mxu0 %v1741
  %1866 = vmatpush1.bf16.msra.mxu0 %v1740
  %1867 = vmatprep.subr.bf16.mxu0 0
  %1868 = vmatpush2.bf16.msra.mxu0 0
  %1869 = vmatprep.subr.bf16.mxu0 0
  %1870 = vmatpush2.bf16.msra.mxu0 0
  %1871 = vmatprep.subr.bf16.mxu0 0
  %1872 = vmatpush2.bf16.msra.mxu0 0
  %1873 = vmatprep.subr.bf16.mxu0 0
  %1874 = vmatpush2.bf16.msra.mxu0 0
  %1875 = vmatprep.subr.bf16.mxu0 0
  %1876 = vmatpush2.bf16.msra.mxu0 0
  %1877 = vmatprep.subr.bf16.mxu0 0
  %1878 = vmatpush2.bf16.msra.mxu0 0
  %1879 = vmatprep.subr.bf16.mxu0 0
  %1880 = vmatpush2.bf16.msra.mxu0 0
  %1881 = vmatprep.subr.bf16.mxu0 %v1789
  %1882 = vmatpush2.bf16.msra.mxu0 %v1788
  %1883 = vmatprep.mubr.bf16.mxu0 %v1849
  %1884 = vmatmul.mubr.bf16.gmra.mxu0 %v1575
  %v1885 = vpop.f32.mrf.mxu0
  %v1886 = vadd.f32 0.0, %v1885
  %v1887 = vpop.f32.mrf.mxu0
  %v1888 = vadd.f32 0.0, %v1887
  %v1889 = vpop.f32.mrf.mxu0
  %v1890 = vpop.f32.mrf.mxu0
  %1891 = vdwg.mxu0
  %1892 = vmatprep.subr.bf16.mxu0 %v1785
  %1893 = vmatpush1.bf16.msra.mxu0 %v1784
  %1894 = vmatprep.subr.bf16.mxu0 %v1779
  %1895 = vmatpush1.bf16.msra.mxu0 %v1778
  %1896 = vmatprep.subr.bf16.mxu0 %v1773
  %1897 = vmatpush1.bf16.msra.mxu0 %v1772
  %1898 = vmatprep.subr.bf16.mxu0 %v1767
  %1899 = vmatpush1.bf16.msra.mxu0 %v1766
  %1900 = vmatprep.subr.bf16.mxu0 %v1761
  %1901 = vmatpush1.bf16.msra.mxu0 %v1760
  %1902 = vmatprep.subr.bf16.mxu0 %v1755
  %1903 = vmatpush1.bf16.msra.mxu0 %v1754
  %1904 = vmatprep.subr.bf16.mxu0 %v1749
  %1905 = vmatpush1.bf16.msra.mxu0 %v1748
  %1906 = vmatprep.subr.bf16.mxu0 %v1743
  %1907 = vmatpush1.bf16.msra.mxu0 %v1742
  %1908 = vmatprep.subr.bf16.mxu0 0
  %1909 = vmatpush2.bf16.msra.mxu0 0
  %1910 = vmatprep.subr.bf16.mxu0 0
  %1911 = vmatpush2.bf16.msra.mxu0 0
  %1912 = vmatprep.subr.bf16.mxu0 0
  %1913 = vmatpush2.bf16.msra.mxu0 0
  %1914 = vmatprep.subr.bf16.mxu0 0
  %1915 = vmatpush2.bf16.msra.mxu0 0
  %1916 = vmatprep.subr.bf16.mxu0 0
  %1917 = vmatpush2.bf16.msra.mxu0 0
  %1918 = vmatprep.subr.bf16.mxu0 0
  %1919 = vmatpush2.bf16.msra.mxu0 0
  %1920 = vmatprep.subr.bf16.mxu0 0
  %1921 = vmatpush2.bf16.msra.mxu0 0
  %1922 = vmatprep.subr.bf16.mxu0 %v1791
  %1923 = vmatpush2.bf16.msra.mxu0 %v1790
  %1924 = vmatprep.mubr.bf16.mxu0 %v1849
  %1925 = vmatmul.mubr.bf16.gmra.mxu0 %v1575
  %v1926 = vpop.f32.mrf.mxu0
  %v1927 = vadd.f32 0.0, %v1926
  %v1928 = vpop.f32.mrf.mxu0
  %v1929 = vadd.f32 0.0, %v1928
  %v1930 = vpop.f32.mrf.mxu0
  %v1931 = vpop.f32.mrf.mxu0
  %1932 = vdwg.mxu0
  %1933 = vmatprep.subr.bf16.mxu0 %v1787
  %1934 = vmatpush1.bf16.msra.mxu0 %v1786
  %1935 = vmatprep.subr.bf16.mxu0 %v1781
  %1936 = vmatpush1.bf16.msra.mxu0 %v1780
  %1937 = vmatprep.subr.bf16.mxu0 %v1775
  %1938 = vmatpush1.bf16.msra.mxu0 %v1774
  %1939 = vmatprep.subr.bf16.mxu0 %v1769
  %1940 = vmatpush1.bf16.msra.mxu0 %v1768
  %1941 = vmatprep.subr.bf16.mxu0 %v1763
  %1942 = vmatpush1.bf16.msra.mxu0 %v1762
  %1943 = vmatprep.subr.bf16.mxu0 %v1757
  %1944 = vmatpush1.bf16.msra.mxu0 %v1756
  %1945 = vmatprep.subr.bf16.mxu0 %v1751
  %1946 = vmatpush1.bf16.msra.mxu0 %v1750
  %1947 = vmatprep.subr.bf16.mxu0 %v1745
  %1948 = vmatpush1.bf16.msra.mxu0 %v1744
  %1949 = vmatprep.subr.bf16.mxu0 0
  %1950 = vmatpush2.bf16.msra.mxu0 0
  %1951 = vmatprep.subr.bf16.mxu0 0
  %1952 = vmatpush2.bf16.msra.mxu0 0
  %1953 = vmatprep.subr.bf16.mxu0 0
  %1954 = vmatpush2.bf16.msra.mxu0 0
  %1955 = vmatprep.subr.bf16.mxu0 0
  %1956 = vmatpush2.bf16.msra.mxu0 0
  %1957 = vmatprep.subr.bf16.mxu0 0
  %1958 = vmatpush2.bf16.msra.mxu0 0
  %1959 = vmatprep.subr.bf16.mxu0 0
  %1960 = vmatpush2.bf16.msra.mxu0 0
  %1961 = vmatprep.subr.bf16.mxu0 0
  %1962 = vmatpush2.bf16.msra.mxu0 0
  %1963 = vmatprep.subr.bf16.mxu0 %v1793
  %1964 = vmatpush2.bf16.msra.mxu0 %v1792
  %1965 = vmatprep.mubr.bf16.mxu0 %v1849
  %1966 = vmatmul.mubr.bf16.gmra.mxu0 %v1575
  %v1967 = vpop.f32.mrf.mxu0
  %v1968 = vadd.f32 0.0, %v1967
  %v1969 = vpop.f32.mrf.mxu0
  %v1970 = vadd.f32 0.0, %v1969
  %v1971 = vpop.f32.mrf.mxu0
  %v1972 = vpop.f32.mrf.mxu0
  %1973 = vdwg.mxu0
  %vm1974 = vcmp.ge.f32.partialorder %v1886, 0.0
  %vm1975 = vcmp.ge.f32.partialorder %v1888, 0.0
  %vm1976 = vcmp.ge.f32.partialorder %v1927, 0.0
  %vm1977 = vcmp.ge.f32.partialorder %v1929, 0.0
  %vm1978 = vcmp.ge.f32.partialorder %v1968, 0.0
  %vm1979 = vcmp.ge.f32.partialorder %v1970, 0.0
  %v1980 = vmul.f32 %v1886, 0.01
  %v1981 = vmul.f32 %v1888, 0.01
  %v1982 = vmul.f32 %v1927, 0.01
  %v1983 = vmul.f32 %v1929, 0.01
  %v1984 = vmul.f32 %v1968, 0.01
  %v1985 = vmul.f32 %v1970, 0.01
  %v1986 = vsel %vm1974, %v1886, %v1980
  %v1987 = vsel %vm1975, %v1888, %v1981
  %v1988 = vsel %vm1976, %v1927, %v1982
  %v1989 = vsel %vm1977, %v1929, %v1983
  %v1990 = vsel %vm1978, %v1968, %v1984
  %v1991 = vsel %vm1979, %v1970, %v1985
  %v1992 = vsel %vm992, %v1986, 0.0
  %v1993 = vsel %vm993, %v1987, 0.0
  %v1994 = vsel %vm994, %v1988, 0.0
  %v1995 = vsel %vm995, %v1989, 0.0
  %v1996 = vsel %vm996, %v1990, 0.0
  %v1997 = vsel %vm997, %v1991, 0.0
  %v1998 = vpack.c.bf16 %v1992, %v1992
  %v1999 = vpack.c.bf16 %v1993, %v1993
  %v2000 = vpack.c.bf16 %v1994, %v1994
  %v2001 = vpack.c.bf16 %v1995, %v1995
  %v2002 = vpack.c.bf16 %v1996, %v1996
  %v2003 = vpack.c.bf16 %v1997, %v1997
  %2004 = vst.msk [vmem:[#allocation4] sm:$0xf] %vm1016, 0
  %v2011 = vunpack.c.l.b16 %v1998
  %v2012 = vunpack.c.l.b16 %v1999
  %v2013 = vunpack.c.l.b16 %v2000
  %v2014 = vunpack.c.l.b16 %v2001
  %v2015 = vunpack.c.l.b16 %v2002
  %v2016 = vunpack.c.l.b16 %v2003
  %v2017 = vpack.c.b16 %v2012, %v2011
  %v2018 = vpack.c.b16 %v2014, %v2013
  %v2019 = vpack.c.b16 %v2016, %v2015
  %2020 = vrot.lane.b32.xlu0 %v2017, 19
  %v2021 = vpop.permute.xlu0 %2020
  %2022 = vrot.lane.b32.xlu0 %v2018, 19
  %v2023 = vpop.permute.xlu0 %2022
  %2024 = vrot.lane.b32.xlu0 %v2019, 19
  %v2025 = vpop.permute.xlu0 %2024
  %v2026 = vrot.slane %v2021, 4
  %v2027 = vrot.slane %v2023, 4
  %v2028 = vrot.slane %v2025, 4
  %v2029 = vsel %vm1061, %v2026, %v2021
  %v2030 = vsel %vm68, %v2026, %v2027
  %v2031 = vsel %vm1061, %v2030, %v2023
  %v2032 = vsel %vm68, %v2027, %v2028
  %v2033 = vsel %vm1061, %v2032, %v2025
  %2037 = vst.msk [vmem:[#allocation4] sm:$0xff] %vm1080, %v2029
  %2038 = vst [vmem:[#allocation4 + $0x8] sm:$0xff] %v2031
  %2039 = vst.msk [vmem:[#allocation4 + $0x10] sm:$0xff] %vm1084, %v2033
  %v2040 = vld [vmem:[#allocation4] sm:$0xff]
  %v2041 = vld [vmem:[#allocation4 + $0x8] sm:$0xff]
  %v2042 = vld [vmem:[#allocation4 + $0x10] sm:$0xff]
  %2043 = vst [vmem:[#allocation2] sm:$0xff] %v2040
  %2044 = vst [vmem:[#allocation2 + $0x8] sm:$0xff] %v2041
  %2045 = vst.msk [vmem:[#allocation2 + $0x10] sm:$0xff] %vm33, %v2042
  %v2046 = vld [vmem:[#allocation4] sm:$0xff]
  %v2047 = vld [vmem:[#allocation4 + $0x8] sm:$0xff]
  %v2048 = vld [vmem:[#allocation4 + $0x10] sm:$0xff]
  %2052 = vrot.lane.b32.xlu0 %v2046, 127
  %v2053 = vpop.permute.xlu0 %2052
  %2054 = vrot.lane.b32.xlu0 %v2047, 127
  %v2055 = vpop.permute.xlu0 %2054
  %2056 = vrot.lane.b32.xlu0 %v2048, 127
  %v2057 = vpop.permute.xlu0 %2056
  %v2058 = vrot.slane %v2053, 4
  %v2059 = vrot.slane %v2055, 4
  %v2060 = vrot.slane %v2057, 4
  %v2061 = vsel %vm68, %v2058, %v2059
  %v2062 = vsel %vm70, %v2053, %v2061
  %v2063 = vsel %vm68, %v2059, %v2060
  %v2064 = vsel %vm70, %v2055, %v2063
  %v2065 = vsel %vm70, %v2057, %v2060
  %2069 = vst [vmem:[#allocation2 + $0x18] sm:$0xff] %v2062
  %2070 = vst [vmem:[#allocation2 + $0x20] sm:$0xff] %v2064
  %2071 = vst.msk [vmem:[#allocation2 + $0x28] sm:$0xff] %vm33, %v2065
  %v2072 = vld [vmem:[#allocation4] sm:$0xff]
  %v2073 = vld [vmem:[#allocation4 + $0x8] sm:$0xff]
  %v2074 = vld [vmem:[#allocation4 + $0x10] sm:$0xff]
  %2078 = vrot.lane.b32.xlu0 %v2072, 126
  %v2079 = vpop.permute.xlu0 %2078
  %2080 = vrot.lane.b32.xlu0 %v2073, 126
  %v2081 = vpop.permute.xlu0 %2080
  %2082 = vrot.lane.b32.xlu0 %v2074, 126
  %v2083 = vpop.permute.xlu0 %2082
  %v2084 = vrot.slane %v2079, 4
  %v2085 = vrot.slane %v2081, 4
  %v2086 = vrot.slane %v2083, 4
  %v2087 = vsel %vm68, %v2084, %v2085
  %v2088 = vsel %vm123, %v2079, %v2087
  %v2089 = vsel %vm68, %v2085, %v2086
  %v2090 = vsel %vm123, %v2081, %v2089
  %v2091 = vsel %vm123, %v2083, %v2086
  %2095 = vst [vmem:[#allocation2 + $0x30] sm:$0xff] %v2088
  %2096 = vst [vmem:[#allocation2 + $0x38] sm:$0xff] %v2090
  %2097 = vst.msk [vmem:[#allocation2 + $0x40] sm:$0xff] %vm33, %v2091
  %v2098 = vld [vmem:[#allocation4] sm:$0xff]
  %v2099 = vld [vmem:[#allocation4 + $0x8] sm:$0xff]
  %v2100 = vld [vmem:[#allocation4 + $0x10] sm:$0xff]
  %2104 = vrot.lane.b32.xlu0 %v2098, 110
  %v2105 = vpop.permute.xlu0 %2104
  %2106 = vrot.lane.b32.xlu0 %v2099, 110
  %v2107 = vpop.permute.xlu0 %2106
  %2108 = vrot.lane.b32.xlu0 %v2100, 110
  %v2109 = vpop.permute.xlu0 %2108
  %v2110 = vrot.slane %v2105, 4
  %v2111 = vrot.slane %v2107, 4
  %v2112 = vrot.slane %v2109, 4
  %v2113 = vsel %vm68, %v2110, %v2111
  %v2114 = vsel %vm176, %v2105, %v2113
  %v2115 = vsel %vm68, %v2111, %v2112
  %v2116 = vsel %vm176, %v2107, %v2115
  %v2117 = vsel %vm176, %v2109, %v2112
  %2121 = vst [vmem:[#allocation2 + $0x48] sm:$0xff] %v2114
  %2122 = vst [vmem:[#allocation2 + $0x50] sm:$0xff] %v2116
  %2123 = vst.msk [vmem:[#allocation2 + $0x58] sm:$0xff] %vm33, %v2117
  %v2124 = vld [vmem:[#allocation4] sm:$0xff]
  %v2125 = vld [vmem:[#allocation4 + $0x8] sm:$0xff]
  %v2126 = vld [vmem:[#allocation4 + $0x10] sm:$0xff]
  %2130 = vrot.lane.b32.xlu0 %v2124, 109
  %v2131 = vpop.permute.xlu0 %2130
  %2132 = vrot.lane.b32.xlu0 %v2125, 109
  %v2133 = vpop.permute.xlu0 %2132
  %2134 = vrot.lane.b32.xlu0 %v2126, 109
  %v2135 = vpop.permute.xlu0 %2134
  %v2136 = vrot.slane %v2131, 4
  %v2137 = vrot.slane %v2133, 4
  %v2138 = vrot.slane %v2135, 4
  %v2139 = vsel %vm68, %v2136, %v2137
  %v2140 = vsel %vm229, %v2131, %v2139
  %v2141 = vsel %vm68, %v2137, %v2138
  %v2142 = vsel %vm229, %v2133, %v2141
  %v2143 = vsel %vm229, %v2135, %v2138
  %2147 = vst [vmem:[#allocation2 + $0x60] sm:$0xff] %v2140
  %2148 = vst [vmem:[#allocation2 + $0x68] sm:$0xff] %v2142
  %2149 = vst.msk [vmem:[#allocation2 + $0x70] sm:$0xff] %vm33, %v2143
  %v2150 = vld [vmem:[#allocation4] sm:$0xff]
  %v2151 = vld [vmem:[#allocation4 + $0x8] sm:$0xff]
  %v2152 = vld [vmem:[#allocation4 + $0x10] sm:$0xff]
  %2156 = vrot.lane.b32.xlu0 %v2150, 108
  %v2157 = vpop.permute.xlu0 %2156
  %2158 = vrot.lane.b32.xlu0 %v2151, 108
  %v2159 = vpop.permute.xlu0 %2158
  %2160 = vrot.lane.b32.xlu0 %v2152, 108
  %v2161 = vpop.permute.xlu0 %2160
  %v2162 = vrot.slane %v2157, 4
  %v2163 = vrot.slane %v2159, 4
  %v2164 = vrot.slane %v2161, 4
  %v2165 = vsel %vm68, %v2162, %v2163
  %v2166 = vsel %vm282, %v2157, %v2165
  %v2167 = vsel %vm68, %v2163, %v2164
  %v2168 = vsel %vm282, %v2159, %v2167
  %v2169 = vsel %vm282, %v2161, %v2164
  %2173 = vst [vmem:[#allocation2 + $0x78] sm:$0xff] %v2166
  %2174 = vst [vmem:[#allocation2 + $0x80] sm:$0xff] %v2168
  %2175 = vst.msk [vmem:[#allocation2 + $0x88] sm:$0xff] %vm33, %v2169
  %v2176 = vld [vmem:[#allocation4] sm:$0xff]
  %v2177 = vld [vmem:[#allocation4 + $0x8] sm:$0xff]
  %v2178 = vld [vmem:[#allocation4 + $0x10] sm:$0xff]
  %2182 = vrot.lane.b32.xlu0 %v2176, 92
  %v2183 = vpop.permute.xlu0 %2182
  %2184 = vrot.lane.b32.xlu0 %v2177, 92
  %v2185 = vpop.permute.xlu0 %2184
  %2186 = vrot.lane.b32.xlu0 %v2178, 92
  %v2187 = vpop.permute.xlu0 %2186
  %v2188 = vrot.slane %v2183, 4
  %v2189 = vrot.slane %v2185, 4
  %v2190 = vrot.slane %v2187, 4
  %v2191 = vsel %vm68, %v2188, %v2189
  %v2192 = vsel %vm335, %v2183, %v2191
  %v2193 = vsel %vm68, %v2189, %v2190
  %v2194 = vsel %vm335, %v2185, %v2193
  %v2195 = vsel %vm335, %v2187, %v2190
  %2199 = vst [vmem:[#allocation2 + $0x90] sm:$0xff] %v2192
  %2200 = vst [vmem:[#allocation2 + $0x98] sm:$0xff] %v2194
  %2201 = vst.msk [vmem:[#allocation2 + $0xa0] sm:$0xff] %vm33, %v2195
  %v2202 = vld [vmem:[#allocation4] sm:$0xff]
  %v2203 = vld [vmem:[#allocation4 + $0x8] sm:$0xff]
  %v2204 = vld [vmem:[#allocation4 + $0x10] sm:$0xff]
  %2208 = vrot.lane.b32.xlu0 %v2202, 91
  %v2209 = vpop.permute.xlu0 %2208
  %2210 = vrot.lane.b32.xlu0 %v2203, 91
  %v2211 = vpop.permute.xlu0 %2210
  %2212 = vrot.lane.b32.xlu0 %v2204, 91
  %v2213 = vpop.permute.xlu0 %2212
  %v2214 = vrot.slane %v2209, 4
  %v2215 = vrot.slane %v2211, 4
  %v2216 = vrot.slane %v2213, 4
  %v2217 = vsel %vm68, %v2214, %v2215
  %v2218 = vsel %vm388, %v2209, %v2217
  %v2219 = vsel %vm68, %v2215, %v2216
  %v2220 = vsel %vm388, %v2211, %v2219
  %v2221 = vsel %vm388, %v2213, %v2216
  %2225 = vst [vmem:[#allocation2 + $0xa8] sm:$0xff] %v2218
  %2226 = vst [vmem:[#allocation2 + $0xb0] sm:$0xff] %v2220
  %2227 = vst.msk [vmem:[#allocation2 + $0xb8] sm:$0xff] %vm33, %v2221
  %v2228 = vld [vmem:[#allocation4] sm:$0xff]
  %v2229 = vld [vmem:[#allocation4 + $0x8] sm:$0xff]
  %v2230 = vld [vmem:[#allocation4 + $0x10] sm:$0xff]
  %2234 = vrot.lane.b32.xlu0 %v2228, 90
  %v2235 = vpop.permute.xlu0 %2234
  %2236 = vrot.lane.b32.xlu0 %v2229, 90
  %v2237 = vpop.permute.xlu0 %2236
  %2238 = vrot.lane.b32.xlu0 %v2230, 90
  %v2239 = vpop.permute.xlu0 %2238
  %v2240 = vrot.slane %v2235, 4
  %v2241 = vrot.slane %v2237, 4
  %v2242 = vrot.slane %v2239, 4
  %v2243 = vsel %vm68, %v2240, %v2241
  %v2244 = vsel %vm441, %v2235, %v2243
  %v2245 = vsel %vm68, %v2241, %v2242
  %v2246 = vsel %vm441, %v2237, %v2245
  %v2247 = vsel %vm441, %v2239, %v2242
  %2251 = vst [vmem:[#allocation2 + $0xc0] sm:$0xff] %v2244
  %2252 = vst [vmem:[#allocation2 + $0xc8] sm:$0xff] %v2246
  %2253 = vst.msk [vmem:[#allocation2 + $0xd0] sm:$0xff] %vm33, %v2247
  %v2254 = vld [vmem:[#allocation2] sm:$0xff]
  %v2255 = vld [vmem:[#allocation2 + $0x8] sm:$0xff]
  %v2256 = vld [vmem:[#allocation2 + $0x10] sm:$0xff]
  %v2257 = vld [vmem:[#allocation2 + $0x18] sm:$0xff]
  %v2258 = vld [vmem:[#allocation2 + $0x20] sm:$0xff]
  %v2259 = vld [vmem:[#allocation2 + $0x28] sm:$0xff]
  %v2260 = vld [vmem:[#allocation2 + $0x30] sm:$0xff]
  %v2261 = vld [vmem:[#allocation2 + $0x38] sm:$0xff]
  %v2262 = vld [vmem:[#allocation2 + $0x40] sm:$0xff]
  %v2263 = vld [vmem:[#allocation2 + $0x48] sm:$0xff]
  %v2264 = vld [vmem:[#allocation2 + $0x50] sm:$0xff]
  %v2265 = vld [vmem:[#allocation2 + $0x58] sm:$0xff]
  %v2266 = vld [vmem:[#allocation2 + $0x60] sm:$0xff]
  %v2267 = vld [vmem:[#allocation2 + $0x68] sm:$0xff]
  %v2268 = vld [vmem:[#allocation2 + $0x70] sm:$0xff]
  %v2269 = vld [vmem:[#allocation2 + $0x78] sm:$0xff]
  %v2270 = vld [vmem:[#allocation2 + $0x80] sm:$0xff]
  %v2271 = vld [vmem:[#allocation2 + $0x88] sm:$0xff]
  %v2272 = vld [vmem:[#allocation2 + $0x90] sm:$0xff]
  %v2273 = vld [vmem:[#allocation2 + $0x98] sm:$0xff]
  %v2274 = vld [vmem:[#allocation2 + $0xa0] sm:$0xff]
  %v2275 = vld [vmem:[#allocation2 + $0xa8] sm:$0xff]
  %v2276 = vld [vmem:[#allocation2 + $0xb0] sm:$0xff]
  %v2277 = vld [vmem:[#allocation2 + $0xb8] sm:$0xff]
  %v2278 = vld [vmem:[#allocation2 + $0xc0] sm:$0xff]
  %v2279 = vld [vmem:[#allocation2 + $0xc8] sm:$0xff]
  %v2280 = vld [vmem:[#allocation2 + $0xd0] sm:$0xff]
  %v2281 = vld [vmem:[%s4] sm:$0xf]
  %v2309 = vunpack.c.l.b16 %v2254
  %v2310 = vunpack.c.h.b16 %v2254
  %v2311 = vunpack.c.l.b16 %v2255
  %v2312 = vunpack.c.h.b16 %v2255
  %v2313 = vunpack.c.l.b16 %v2256
  %v2314 = vunpack.c.h.b16 %v2256
  %v2315 = vunpack.c.l.b16 %v2257
  %v2316 = vunpack.c.h.b16 %v2257
  %v2317 = vunpack.c.l.b16 %v2258
  %v2318 = vunpack.c.h.b16 %v2258
  %v2319 = vunpack.c.l.b16 %v2259
  %v2320 = vunpack.c.h.b16 %v2259
  %v2321 = vunpack.c.l.b16 %v2260
  %v2322 = vunpack.c.h.b16 %v2260
  %v2323 = vunpack.c.l.b16 %v2261
  %v2324 = vunpack.c.h.b16 %v2261
  %v2325 = vunpack.c.l.b16 %v2262
  %v2326 = vunpack.c.h.b16 %v2262
  %v2327 = vunpack.c.l.b16 %v2263
  %v2328 = vunpack.c.h.b16 %v2263
  %v2329 = vunpack.c.l.b16 %v2264
  %v2330 = vunpack.c.h.b16 %v2264
  %v2331 = vunpack.c.l.b16 %v2265
  %v2332 = vunpack.c.h.b16 %v2265
  %v2333 = vunpack.c.l.b16 %v2266
  %v2334 = vunpack.c.h.b16 %v2266
  %v2335 = vunpack.c.l.b16 %v2267
  %v2336 = vunpack.c.h.b16 %v2267
  %v2337 = vunpack.c.l.b16 %v2268
  %v2338 = vunpack.c.h.b16 %v2268
  %v2339 = vunpack.c.l.b16 %v2269
  %v2340 = vunpack.c.h.b16 %v2269
  %v2341 = vunpack.c.l.b16 %v2270
  %v2342 = vunpack.c.h.b16 %v2270
  %v2343 = vunpack.c.l.b16 %v2271
  %v2344 = vunpack.c.h.b16 %v2271
  %v2345 = vunpack.c.l.b16 %v2272
  %v2346 = vunpack.c.h.b16 %v2272
  %v2347 = vunpack.c.l.b16 %v2273
  %v2348 = vunpack.c.h.b16 %v2273
  %v2349 = vunpack.c.l.b16 %v2274
  %v2350 = vunpack.c.h.b16 %v2274
  %v2351 = vunpack.c.l.b16 %v2275
  %v2352 = vunpack.c.h.b16 %v2275
  %v2353 = vunpack.c.l.b16 %v2276
  %v2354 = vunpack.c.h.b16 %v2276
  %v2355 = vunpack.c.l.b16 %v2277
  %v2356 = vunpack.c.h.b16 %v2277
  %v2357 = vunpack.c.l.b16 %v2278
  %v2358 = vunpack.c.h.b16 %v2278
  %v2359 = vunpack.c.l.b16 %v2279
  %v2360 = vunpack.c.h.b16 %v2279
  %v2361 = vunpack.c.l.b16 %v2280
  %v2362 = vunpack.c.h.b16 %v2280
  %v2363 = vpack.c.b16 %v2315, %v2309
  %v2364 = vpack.c.b16 %v2316, %v2310
  %v2365 = vpack.c.b16 %v2317, %v2311
  %v2366 = vpack.c.b16 %v2318, %v2312
  %v2367 = vpack.c.b16 %v2319, %v2313
  %v2368 = vpack.c.b16 %v2320, %v2314
  %v2369 = vpack.c.b16 %v2327, %v2321
  %v2370 = vpack.c.b16 %v2328, %v2322
  %v2371 = vpack.c.b16 %v2329, %v2323
  %v2372 = vpack.c.b16 %v2330, %v2324
  %v2373 = vpack.c.b16 %v2331, %v2325
  %v2374 = vpack.c.b16 %v2332, %v2326
  %v2375 = vpack.c.b16 %v2339, %v2333
  %v2376 = vpack.c.b16 %v2340, %v2334
  %v2377 = vpack.c.b16 %v2341, %v2335
  %v2378 = vpack.c.b16 %v2342, %v2336
  %v2379 = vpack.c.b16 %v2343, %v2337
  %v2380 = vpack.c.b16 %v2344, %v2338
  %v2381 = vpack.c.b16 %v2351, %v2345
  %v2382 = vpack.c.b16 %v2352, %v2346
  %v2383 = vpack.c.b16 %v2353, %v2347
  %v2384 = vpack.c.b16 %v2354, %v2348
  %v2385 = vpack.c.b16 %v2355, %v2349
  %v2386 = vpack.c.b16 %v2356, %v2350
  %v2387 = vpack.c.b16 %v2357, %v2357
  %v2388 = vpack.c.b16 %v2358, %v2358
  %v2389 = vpack.c.b16 %v2359, %v2359
  %v2390 = vpack.c.b16 %v2360, %v2360
  %v2391 = vpack.c.b16 %v2361, %v2361
  %v2392 = vpack.c.b16 %v2362, %v2362
  %vm2417 = vcmask 588800
  %v2419 = vsel %vm2417, %v2281, 0
  %v2422 = vsel %vm31, %v2387, 0
  %v2425 = vsel %vm31, %v2388, 0
  %v2428 = vsel %vm31, %v2389, 0
  %v2431 = vsel %vm31, %v2390, 0
  %v2434 = vsel %vm31, %v2391, 0
  %v2437 = vsel %vm31, %v2392, 0
  %2439 = vmatprep.subr.bf16.mxu0 0
  %2440 = vmatpush1.bf16.msra.mxu0 0
  %2441 = vmatprep.subr.bf16.mxu0 0
  %2442 = vmatpush1.bf16.msra.mxu0 0
  %2443 = vmatprep.subr.bf16.mxu0 0
  %2444 = vmatpush1.bf16.msra.mxu0 0
  %2445 = vmatprep.subr.bf16.mxu0 %v2425
  %2446 = vmatpush1.bf16.msra.mxu0 %v2422
  %2447 = vmatprep.subr.bf16.mxu0 %v2382
  %2448 = vmatpush1.bf16.msra.mxu0 %v2381
  %2449 = vmatprep.subr.bf16.mxu0 %v2376
  %2450 = vmatpush1.bf16.msra.mxu0 %v2375
  %2451 = vmatprep.subr.bf16.mxu0 %v2370
  %2452 = vmatpush1.bf16.msra.mxu0 %v2369
  %2453 = vmatprep.subr.bf16.mxu0 %v2364
  %2454 = vmatpush1.bf16.msra.mxu0 %v2363
  %2455 = vmatprep.subr.bf16.mxu0 0
  %2456 = vmatpush2.bf16.msra.mxu0 0
  %2457 = vmatprep.subr.bf16.mxu0 0
  %2458 = vmatpush2.bf16.msra.mxu0 0
  %2459 = vmatprep.subr.bf16.mxu0 0
  %2460 = vmatpush2.bf16.msra.mxu0 0
  %2461 = vmatprep.subr.bf16.mxu0 0
  %2462 = vmatpush2.bf16.msra.mxu0 0
  %2463 = vmatprep.subr.bf16.mxu0 0
  %2464 = vmatpush2.bf16.msra.mxu0 0
  %2465 = vmatprep.subr.bf16.mxu0 0
  %2466 = vmatpush2.bf16.msra.mxu0 0
  %2467 = vmatprep.subr.bf16.mxu0 0
  %2468 = vmatpush2.bf16.msra.mxu0 0
  %2469 = vmatprep.subr.bf16.mxu0 0
  %2470 = vmatpush2.bf16.msra.mxu0 0
  %2471 = vmatprep.mubr.bf16.mxu0 0
  %2472 = vmatmul.mubr.bf16.gmra.mxu0 %v2419
  %v2473 = vpop.f32.mrf.mxu0
  %v2474 = vadd.f32 0.0, %v2473
  %v2475 = vpop.f32.mrf.mxu0
  %v2476 = vadd.f32 0.0, %v2475
  %v2477 = vpop.f32.mrf.mxu0
  %v2478 = vpop.f32.mrf.mxu0
  %2479 = vdwg.mxu0
  %2480 = vmatprep.subr.bf16.mxu0 0
  %2481 = vmatpush1.bf16.msra.mxu0 0
  %2482 = vmatprep.subr.bf16.mxu0 0
  %2483 = vmatpush1.bf16.msra.mxu0 0
  %2484 = vmatprep.subr.bf16.mxu0 0
  %2485 = vmatpush1.bf16.msra.mxu0 0
  %2486 = vmatprep.subr.bf16.mxu0 %v2431
  %2487 = vmatpush1.bf16.msra.mxu0 %v2428
  %2488 = vmatprep.subr.bf16.mxu0 %v2384
  %2489 = vmatpush1.bf16.msra.mxu0 %v2383
  %2490 = vmatprep.subr.bf16.mxu0 %v2378
  %2491 = vmatpush1.bf16.msra.mxu0 %v2377
  %2492 = vmatprep.subr.bf16.mxu0 %v2372
  %2493 = vmatpush1.bf16.msra.mxu0 %v2371
  %2494 = vmatprep.subr.bf16.mxu0 %v2366
  %2495 = vmatpush1.bf16.msra.mxu0 %v2365
  %2496 = vmatprep.subr.bf16.mxu0 0
  %2497 = vmatpush2.bf16.msra.mxu0 0
  %2498 = vmatprep.subr.bf16.mxu0 0
  %2499 = vmatpush2.bf16.msra.mxu0 0
  %2500 = vmatprep.subr.bf16.mxu0 0
  %2501 = vmatpush2.bf16.msra.mxu0 0
  %2502 = vmatprep.subr.bf16.mxu0 0
  %2503 = vmatpush2.bf16.msra.mxu0 0
  %2504 = vmatprep.subr.bf16.mxu0 0
  %2505 = vmatpush2.bf16.msra.mxu0 0
  %2506 = vmatprep.subr.bf16.mxu0 0
  %2507 = vmatpush2.bf16.msra.mxu0 0
  %2508 = vmatprep.subr.bf16.mxu0 0
  %2509 = vmatpush2.bf16.msra.mxu0 0
  %2510 = vmatprep.subr.bf16.mxu0 0
  %2511 = vmatpush2.bf16.msra.mxu0 0
  %2512 = vmatprep.mubr.bf16.mxu0 0
  %2513 = vmatmul.mubr.bf16.gmra.mxu0 %v2419
  %v2514 = vpop.f32.mrf.mxu0
  %v2515 = vadd.f32 0.0, %v2514
  %v2516 = vpop.f32.mrf.mxu0
  %v2517 = vadd.f32 0.0, %v2516
  %v2518 = vpop.f32.mrf.mxu0
  %v2519 = vpop.f32.mrf.mxu0
  %2520 = vdwg.mxu0
  %2521 = vmatprep.subr.bf16.mxu0 0
  %2522 = vmatpush1.bf16.msra.mxu0 0
  %2523 = vmatprep.subr.bf16.mxu0 0
  %2524 = vmatpush1.bf16.msra.mxu0 0
  %2525 = vmatprep.subr.bf16.mxu0 0
  %2526 = vmatpush1.bf16.msra.mxu0 0
  %2527 = vmatprep.subr.bf16.mxu0 %v2437
  %2528 = vmatpush1.bf16.msra.mxu0 %v2434
  %2529 = vmatprep.subr.bf16.mxu0 %v2386
  %2530 = vmatpush1.bf16.msra.mxu0 %v2385
  %2531 = vmatprep.subr.bf16.mxu0 %v2380
  %2532 = vmatpush1.bf16.msra.mxu0 %v2379
  %2533 = vmatprep.subr.bf16.mxu0 %v2374
  %2534 = vmatpush1.bf16.msra.mxu0 %v2373
  %2535 = vmatprep.subr.bf16.mxu0 %v2368
  %2536 = vmatpush1.bf16.msra.mxu0 %v2367
  %2537 = vmatprep.subr.bf16.mxu0 0
  %2538 = vmatpush2.bf16.msra.mxu0 0
  %2539 = vmatprep.subr.bf16.mxu0 0
  %2540 = vmatpush2.bf16.msra.mxu0 0
  %2541 = vmatprep.subr.bf16.mxu0 0
  %2542 = vmatpush2.bf16.msra.mxu0 0
  %2543 = vmatprep.subr.bf16.mxu0 0
  %2544 = vmatpush2.bf16.msra.mxu0 0
  %2545 = vmatprep.subr.bf16.mxu0 0
  %2546 = vmatpush2.bf16.msra.mxu0 0
  %2547 = vmatprep.subr.bf16.mxu0 0
  %2548 = vmatpush2.bf16.msra.mxu0 0
  %2549 = vmatprep.subr.bf16.mxu0 0
  %2550 = vmatpush2.bf16.msra.mxu0 0
  %2551 = vmatprep.subr.bf16.mxu0 0
  %2552 = vmatpush2.bf16.msra.mxu0 0
  %2553 = vmatprep.mubr.bf16.mxu0 0
  %2554 = vmatmul.mubr.bf16.gmra.mxu0 %v2419
  %v2555 = vpop.f32.mrf.mxu0
  %v2556 = vadd.f32 0.0, %v2555
  %v2557 = vpop.f32.mrf.mxu0
  %v2558 = vadd.f32 0.0, %v2557
  %v2559 = vpop.f32.mrf.mxu0
  %v2560 = vpop.f32.mrf.mxu0
  %2561 = vdwg.mxu0
  %v2562 = vsel %vm992, %v2474, 0.0
  %v2563 = vsel %vm993, %v2476, 0.0
  %v2564 = vsel %vm994, %v2515, 0.0
  %v2565 = vsel %vm995, %v2517, 0.0
  %v2566 = vsel %vm996, %v2556, 0.0
  %v2567 = vsel %vm997, %v2558, 0.0
  %2568 = vst [vmem:[%s5] sm:$0xff] %v2562
  %2569 = vst [vmem:[%s5 + $0x8] sm:$0xff] %v2563
  %2570 = vst [vmem:[%s5 + $0x10] sm:$0xff] %v2564
  %2571 = vst [vmem:[%s5 + $0x18] sm:$0xff] %v2565
  %2572 = vst [vmem:[%s5 + $0x20] sm:$0xff] %v2566
  %vm2573 = vcmask 64512
  %2574 = vst.msk [vmem:[%s5 + $0x28] sm:$0xff] %vm2573, %v2567
  // Predicated region
  $region22: #{output_cv_block_forward.1} parent=0 // pred_check
    _
  $region23: #{output_cv_block_forward.1} parent=0 // pred_check_branch
    %2576 = sbr.rel (0) target = $region25
  $region24: #{output_cv_block_forward.1} parent=0 // pred_region
    _
  $region25: #{output_cv_block_forward.1} parent=0 // pred_fallthru
    _
  // Predicated region
  $region26: #{output_cv_block_forward.1} parent=0 // pred_check
    _
  $region27: #{output_cv_block_forward.1} parent=0 // pred_check_branch
    %2578 = sbr.rel (0) target = $region29
  $region28: #{output_cv_block_forward.1} parent=0 // pred_region
    _
  $region29: #{output_cv_block_forward.1} parent=0 // pred_fallthru
    _

</llo_original>
